<compile_context>
chip_gen: v5e
topology: v5e:2x2
jax: 0.10.0
libtpu: 0.0.40
codegen_flags: <defaults>
</compile_context>

<pallas_src>
import jax
import jax.numpy as jnp
import numpy as np
from jax.experimental import pallas as pl
from jax.experimental.pallas import tpu as pltpu


# ---------------------------------------------------------------------------
# Fused decoder-step kernel
# ---------------------------------------------------------------------------
def _decoder_kernel(emb_ref, hid_ref, enc_ref, mask_ref,
                    wah_ref, wae_ref, ba_ref, v_ref,
                    wih_e_ref, wih_c_ref, whh_ref, bih_ref, bhh_ref,
                    wo_h_ref, wo_c_ref, wo_e_ref, bo_ref,
                    logits_ref, hnew_ref, attn_ref,
                    h_scr, ctx_scr):
    j = pl.program_id(0)

    # ---- attention + context + GRU cell: compute once, keep in VMEM scratch
    @pl.when(j == 0)
    def _():
        emb = emb_ref[...]                    # (B, E)
        hid = hid_ref[...]                    # (B, D)
        enc = enc_ref[...]                    # (S, B, 2H)
        S, B, H2 = enc.shape
        D = hid.shape[-1]

        # energy = tanh(Linear(cat(hidden, enc_out))) without any concat:
        e_h = jnp.dot(hid, wah_ref[...], preferred_element_type=jnp.float32)   # (B, D)
        e_e = jnp.dot(enc.reshape(S * B, H2), wae_ref[...],
                      preferred_element_type=jnp.float32).reshape(S, B, D)
        energy = jnp.tanh(e_e + e_h[None, :, :] + ba_ref[...][None, :, :])      # (S, B, D)

        # scores[s, b] = v . energy[s, b, :]   (lane reduction)
        scores = jnp.sum(energy * v_ref[...][None, :, :], axis=-1)              # (S, B)
        scores = jnp.where(mask_ref[...] > 0.5, -1000000.0, scores)             # masked_fill
        # softmax over the source axis S (axis 0 in this layout)
        m = jnp.max(scores, axis=0, keepdims=True)
        p = jnp.exp(scores - m)
        inv = pl.reciprocal(jnp.sum(p, axis=0, keepdims=True), approx=True)
        attn = p * inv                                                          # (S, B)

        # context vector: weight[b] = sum_s attn[s,b] * enc[s,b,:]
        ctx = jnp.sum(attn[:, :, None] * enc, axis=0)                           # (B, 2H)

        # single-step GRU cell;  rnn_input = cat(emb, ctx)  ->  split matmuls
        gi = (jnp.dot(emb, wih_e_ref[...], preferred_element_type=jnp.float32)
              + jnp.dot(ctx, wih_c_ref[...], preferred_element_type=jnp.float32)
              + bih_ref[...])                                                   # (B, 3D)
        gh = (jnp.dot(hid, whh_ref[...], preferred_element_type=jnp.float32)
              + bhh_ref[...])                                                   # (B, 3D)
        r = jax.nn.sigmoid(gi[:, :D] + gh[:, :D])
        z = jax.nn.sigmoid(gi[:, D:2 * D] + gh[:, D:2 * D])
        n = jnp.tanh(gi[:, 2 * D:] + r * gh[:, 2 * D:])
        h_new = (1.0 - z) * n + z * hid                                         # (B, D)

        h_scr[...] = h_new
        ctx_scr[...] = ctx
        hnew_ref[...] = h_new          # resident output; written once
        attn_ref[...] = attn           # resident output; written once

    # ---- output projection for this vocab tile (every grid step) ------------
    #   out(cat(output, weight, embedded)) done as split-weight matmuls
    logits_ref[...] = (
        jnp.dot(h_scr[...], wo_h_ref[...], preferred_element_type=jnp.float32)
        + jnp.dot(ctx_scr[...], wo_c_ref[...], preferred_element_type=jnp.float32)
        + jnp.dot(emb_ref[...], wo_e_ref[...], preferred_element_type=jnp.float32)
        + bo_ref[...])


# ---------------------------------------------------------------------------
# Wrapper
# ---------------------------------------------------------------------------
@jax.jit
def decoder_forward(input_ids, hidden, encoder_outputs, mask, params):
    B = input_ids.shape[0]
    S, _, H2 = encoder_outputs.shape
    D = hidden.shape[-1]
    E = params["emb"].shape[-1]
    G = 3 * D
    V = params["bo"].shape[-1]

    emb = params["emb"][input_ids]                 # (B, E) gather stays in XLA
    # TODO(synk): dropout is identity here (inference mode); training-mode
    # dropout would need pltpu.prng_* inside the kernel.
    mask_sb = mask.T.astype(jnp.float32)           # tiny (B*S) transpose

    # lane-dense vocab tiling of the output Linear
    TV = 128 if (V % 128 == 0 and V >= 128) else V
    grid = (pl.cdiv(V, TV),)

    logits, h_new, attn_sb = pl.pallas_call(
        _decoder_kernel,
        out_shape=(jax.ShapeDtypeStruct((B, V), jnp.float32),
                   jax.ShapeDtypeStruct((B, D), jnp.float32),
                   jax.ShapeDtypeStruct((S, B), jnp.float32)),
        grid_spec=pltpu.PrefetchScalarGridSpec(
            num_scalar_prefetch=0,
            grid=grid,
            in_specs=[
                pl.BlockSpec((B, E), lambda j: (0, 0)),         # embedded
                pl.BlockSpec((B, D), lambda j: (0, 0)),         # hidden
                pl.BlockSpec((S, B, H2), lambda j: (0, 0, 0)),  # encoder outputs
                pl.BlockSpec((S, B), lambda j: (0, 0)),         # mask (S,B) f32
                pl.BlockSpec((D, D), lambda j: (0, 0)),         # attn W (hidden part)
                pl.BlockSpec((H2, D), lambda j: (0, 0)),        # attn W (enc part)
                pl.BlockSpec((1, D), lambda j: (0, 0)),         # attn bias
                pl.BlockSpec((1, D), lambda j: (0, 0)),         # attn v
                pl.BlockSpec((E, G), lambda j: (0, 0)),         # GRU W_ih (emb part)
                pl.BlockSpec((H2, G), lambda j: (0, 0)),        # GRU W_ih (ctx part)
                pl.BlockSpec((D, G), lambda j: (0, 0)),         # GRU W_hh
                pl.BlockSpec((1, G), lambda j: (0, 0)),         # GRU b_ih
                pl.BlockSpec((1, G), lambda j: (0, 0)),         # GRU b_hh
                pl.BlockSpec((D, TV), lambda j: (0, j)),        # out W (h part)
                pl.BlockSpec((H2, TV), lambda j: (0, j)),       # out W (ctx part)
                pl.BlockSpec((E, TV), lambda j: (0, j)),        # out W (emb part)
                pl.BlockSpec((1, TV), lambda j: (0, j)),        # out bias
            ],
            out_specs=[
                pl.BlockSpec((B, TV), lambda j: (0, j)),        # logits tile
                pl.BlockSpec((B, D), lambda j: (0, 0)),         # new hidden (resident)
                pl.BlockSpec((S, B), lambda j: (0, 0)),         # attention (resident)
            ],
            scratch_shapes=[pltpu.VMEM((B, D), jnp.float32),    # h_new
                            pltpu.VMEM((B, H2), jnp.float32)],  # context
        ),
        # vocab tiles depend on grid-step-0 state -> sequential grid
        compiler_params=pltpu.CompilerParams(
            dimension_semantics=("arbitrary",)),
    )(emb, hidden, encoder_outputs, mask_sb,
      params["wah_t"], params["wae_t"], params["ba"], params["v"],
      params["wih_e_t"], params["wih_c_t"], params["whh_t"],
      params["bih"], params["bhh"],
      params["wo_h_t"], params["wo_c_t"], params["wo_e_t"], params["bo"])

    # PyTorch returns attn.unsqueeze(1).squeeze(0) == (B, 1, S) for B > 1
    attn = attn_sb.T[:, None, :]
    return logits, h_new, attn


# ---------------------------------------------------------------------------
# Pure-JAX reference (mirrors the PyTorch forward op-for-op)
# ---------------------------------------------------------------------------
def decoder_forward_ref(input_ids, hidden, encoder_outputs, mask, params):
    emb = params["emb"][input_ids]                             # (B, E), dropout=id
    S, B, H2 = encoder_outputs.shape
    D = hidden.shape[-1]

    # Attention.forward
    attn_w_t = jnp.concatenate([params["wah_t"], params["wae_t"]], axis=0)
    hid_rep = jnp.repeat(hidden[:, None, :], S, axis=1)        # (B, S, D)
    enc_bse = jnp.transpose(encoder_outputs, (1, 0, 2))        # (B, S, 2H)
    energy = jnp.tanh(jnp.concatenate([hid_rep, enc_bse], axis=2) @ attn_w_t
                      + params["ba"])                          # (B, S, D)
    scores = jnp.einsum("d,bsd->bs", params["v"][0], energy)
    scores = jnp.where(mask, -1000000.0, scores)
    attn = jax.nn.softmax(scores, axis=1)                      # (B, S)
    weight = jnp.einsum("bs,bsh->bh", attn, enc_bse)           # (B, 2H)

    # single-step GRU
    rnn_in = jnp.concatenate([emb, weight], axis=1)
    wih_t = jnp.concatenate([params["wih_e_t"], params["wih_c_t"]], axis=0)
    gi = rnn_in @ wih_t + params["bih"]
    gh = hidden @ params["whh_t"] + params["bhh"]
    r = jax.nn.sigmoid(gi[:, :D] + gh[:, :D])
    z = jax.nn.sigmoid(gi[:, D:2 * D] + gh[:, D:2 * D])
    n = jnp.tanh(gi[:, 2 * D:] + r * gh[:, 2 * D:])
    h_new = (1.0 - z) * n + z * hidden

    # output Linear on cat(output, weight, embedded)
    wo_t = jnp.concatenate([params["wo_h_t"], params["wo_c_t"],
                            params["wo_e_t"]], axis=0)
    logits = jnp.concatenate([h_new, weight, emb], axis=1) @ wo_t + params["bo"]
    return logits, h_new, attn[:, None, :]


# ---------------------------------------------------------------------------
# Deterministic parameter init (shapes follow the nn.Module __init__,
# stored pre-transposed / pre-split for the concat-free kernel)
# ---------------------------------------------------------------------------
def init_params(key, vocab, emb_dim, enc_hid, dec_hid):
    ks = jax.random.split(key, 14)
    s = 0.1
    H2 = 2 * enc_hid
    G = 3 * dec_hid
    normal = jax.random.normal
    return {
        "emb":     normal(ks[0], (vocab, emb_dim), jnp.float32) * s,
        # Attention: Linear(2*enc_hid + dec_hid, dec_hid); cat order (hidden, enc)
        "wah_t":   normal(ks[1], (dec_hid, dec_hid), jnp.float32) * s,
        "wae_t":   normal(ks[2], (H2, dec_hid), jnp.float32) * s,
        "ba":      normal(ks[3], (1, dec_hid), jnp.float32) * s,
        "v":       normal(ks[4], (1, dec_hid), jnp.float32) * s,
        # GRU(2*enc_hid + emb_dim, dec_hid); input cat order (embedded, context)
        "wih_e_t": normal(ks[5], (emb_dim, G), jnp.float32) * s,
        "wih_c_t": normal(ks[6], (H2, G), jnp.float32) * s,
        "whh_t":   normal(ks[7], (dec_hid, G), jnp.float32) * s,
        "bih":     normal(ks[8], (1, G), jnp.float32) * s,
        "bhh":     normal(ks[9], (1, G), jnp.float32) * s,
        # out: Linear(2*enc_hid + dec_hid + emb_dim, vocab); cat order (h, ctx, emb)
        "wo_h_t":  normal(ks[10], (dec_hid, vocab), jnp.float32) * s,
        "wo_c_t":  normal(ks[11], (H2, vocab), jnp.float32) * s,
        "wo_e_t":  normal(ks[12], (emb_dim, vocab), jnp.float32) * s,
        "bo":      normal(ks[13], (1, vocab), jnp.float32) * s,
    }


if __name__ == "__main__":
    VOCAB, EMB, ENC_HID, DEC_HID = 256, 32, 32, 32
    B, S = 8, 16

    key = jax.random.PRNGKey(0)
    k_in, k_hid, k_enc, k_len, k_p = jax.random.split(key, 5)

    input_ids = jax.random.randint(k_in, (B,), 0, VOCAB, dtype=jnp.int32)
    hidden = jax.random.normal(k_hid, (B, DEC_HID), jnp.float32)
    encoder_outputs = jax.random.normal(k_enc, (S, B, 2 * ENC_HID), jnp.float32)
    lens = jax.random.randint(k_len, (B,), 4, S + 1)
    mask = jnp.arange(S)[None, :] >= lens[:, None]        # (B, S) bool, True = pad
    params = init_params(k_p, VOCAB, EMB, ENC_HID, DEC_HID)

    logits, h_new, attn = decoder_forward(input_ids, hidden, encoder_outputs,
                                          mask, params)
    jax.block_until_ready((logits, h_new, attn))

    # sanity check against the pure-JAX reference
    ref_logits, ref_h, ref_attn = decoder_forward_ref(
        input_ids, hidden, encoder_outputs, mask, params)
    np.testing.assert_allclose(np.asarray(logits), np.asarray(ref_logits),
                               rtol=1e-2, atol=1e-2)
    np.testing.assert_allclose(np.asarray(h_new), np.asarray(ref_h),
                               rtol=1e-2, atol=1e-2)
    np.testing.assert_allclose(np.asarray(attn), np.asarray(ref_attn),
                               rtol=1e-2, atol=1e-2)

    assert logits.shape == (B, VOCAB)
    assert h_new.shape == (B, DEC_HID)
    assert attn.shape == (B, 1, S)
    print("KERNEL_OK")
</pallas_src>

<mosaic_0001>
module attributes {stable_mosaic.version = 11 : i64} {
  func.func @_decoder_kernel(%arg0: i32, %arg1: memref<8x32xf32, #tpu.memory_space<vmem>>, %arg2: memref<8x32xf32, #tpu.memory_space<vmem>>, %arg3: memref<16x8x64xf32, #tpu.memory_space<vmem>>, %arg4: memref<16x8xf32, #tpu.memory_space<vmem>>, %arg5: memref<32x32xf32, #tpu.memory_space<vmem>>, %arg6: memref<64x32xf32, #tpu.memory_space<vmem>>, %arg7: memref<1x32xf32, #tpu.memory_space<vmem>>, %arg8: memref<1x32xf32, #tpu.memory_space<vmem>>, %arg9: memref<32x96xf32, #tpu.memory_space<vmem>>, %arg10: memref<64x96xf32, #tpu.memory_space<vmem>>, %arg11: memref<32x96xf32, #tpu.memory_space<vmem>>, %arg12: memref<1x96xf32, #tpu.memory_space<vmem>>, %arg13: memref<1x96xf32, #tpu.memory_space<vmem>>, %arg14: memref<32x128xf32, #tpu.memory_space<vmem>>, %arg15: memref<64x128xf32, #tpu.memory_space<vmem>>, %arg16: memref<32x128xf32, #tpu.memory_space<vmem>>, %arg17: memref<1x128xf32, #tpu.memory_space<vmem>>, %arg18: memref<8x128xf32, #tpu.memory_space<vmem>>, %arg19: memref<8x32xf32, #tpu.memory_space<vmem>>, %arg20: memref<16x8xf32, #tpu.memory_space<vmem>>, %arg21: memref<8x32xf32, #tpu.memory_space<vmem>>, %arg22: memref<8x64xf32, #tpu.memory_space<vmem>>) attributes {dimension_semantics = [#tpu.dimension_semantics<arbitrary>], iteration_bounds = array<i64: 2>, scalar_prefetch = 0 : i64, scratch_operands = 2 : i64, tpu.core_type = #tpu.core_type<tc>, window_params = [{pipeline_mode = #tpu.pipeline_mode<synchronous>, transform_indices = @transform_0, window_bounds = array<i64: 8, 32>}, {pipeline_mode = #tpu.pipeline_mode<synchronous>, transform_indices = @transform_1, window_bounds = array<i64: 8, 32>}, {pipeline_mode = #tpu.pipeline_mode<synchronous>, transform_indices = @transform_2, window_bounds = array<i64: 16, 8, 64>}, {pipeline_mode = #tpu.pipeline_mode<synchronous>, transform_indices = @transform_3, window_bounds = array<i64: 16, 8>}, {pipeline_mode = #tpu.pipeline_mode<synchronous>, transform_indices = @transform_4, window_bounds = array<i64: 32, 32>}, {pipeline_mode = #tpu.pipeline_mode<synchronous>, transform_indices = @transform_5, window_bounds = array<i64: 64, 32>}, {pipeline_mode = #tpu.pipeline_mode<synchronous>, transform_indices = @transform_6, window_bounds = array<i64: 1, 32>}, {pipeline_mode = #tpu.pipeline_mode<synchronous>, transform_indices = @transform_7, window_bounds = array<i64: 1, 32>}, {pipeline_mode = #tpu.pipeline_mode<synchronous>, transform_indices = @transform_8, window_bounds = array<i64: 32, 96>}, {pipeline_mode = #tpu.pipeline_mode<synchronous>, transform_indices = @transform_9, window_bounds = array<i64: 64, 96>}, {pipeline_mode = #tpu.pipeline_mode<synchronous>, transform_indices = @transform_10, window_bounds = array<i64: 32, 96>}, {pipeline_mode = #tpu.pipeline_mode<synchronous>, transform_indices = @transform_11, window_bounds = array<i64: 1, 96>}, {pipeline_mode = #tpu.pipeline_mode<synchronous>, transform_indices = @transform_12, window_bounds = array<i64: 1, 96>}, {transform_indices = @transform_13, window_bounds = array<i64: 32, 128>}, {transform_indices = @transform_14, window_bounds = array<i64: 64, 128>}, {transform_indices = @transform_15, window_bounds = array<i64: 32, 128>}, {transform_indices = @transform_16, window_bounds = array<i64: 1, 128>}, {transform_indices = @transform_17, window_bounds = array<i64: 8, 128>}, {pipeline_mode = #tpu.pipeline_mode<synchronous>, transform_indices = @transform_18, window_bounds = array<i64: 8, 32>}, {pipeline_mode = #tpu.pipeline_mode<synchronous>, transform_indices = @transform_19, window_bounds = array<i64: 16, 8>}]} {
    %c0_i32 = arith.constant 0 : i32
    %0 = arith.cmpi eq, %arg0, %c0_i32 : i32
    %1 = arith.extui %0 : i1 to i32
    %c0_i32_0 = arith.constant 0 : i32
    %2 = arith.cmpi ne, %1, %c0_i32_0 : i32
    scf.if %2 {
      %c0_18 = arith.constant 0 : index
      %c0_19 = arith.constant 0 : index
      %18 = vector.load %arg1[%c0_18, %c0_19] : memref<8x32xf32, #tpu.memory_space<vmem>>, vector<8x32xf32>
      %c0_20 = arith.constant 0 : index
      %c0_21 = arith.constant 0 : index
      %19 = vector.load %arg2[%c0_20, %c0_21] : memref<8x32xf32, #tpu.memory_space<vmem>>, vector<8x32xf32>
      %c0_22 = arith.constant 0 : index
      %c0_23 = arith.constant 0 : index
      %c0_24 = arith.constant 0 : index
      %20 = vector.load %arg3[%c0_22, %c0_23, %c0_24] : memref<16x8x64xf32, #tpu.memory_space<vmem>>, vector<16x8x64xf32>
      %c0_25 = arith.constant 0 : index
      %c0_26 = arith.constant 0 : index
      %21 = vector.load %arg5[%c0_25, %c0_26] : memref<32x32xf32, #tpu.memory_space<vmem>>, vector<32x32xf32>
      %cst_27 = arith.constant dense<0.000000e+00> : vector<8x32xf32>
      %22 = tpu.matmul %19, %21, %cst_27 {dimension_numbers = #tpu.dot_dimension_numbers<[1], [0], [0], [1], [0, 0, 1, 1], [], []>} : vector<8x32xf32>, vector<32x32xf32>, vector<8x32xf32> -> vector<8x32xf32>
      %23 = vector.shape_cast %20 : vector<16x8x64xf32> to vector<128x64xf32>
      %c0_28 = arith.constant 0 : index
      %c0_29 = arith.constant 0 : index
      %24 = vector.load %arg6[%c0_28, %c0_29] : memref<64x32xf32, #tpu.memory_space<vmem>>, vector<64x32xf32>
      %cst_30 = arith.constant dense<0.000000e+00> : vector<128x32xf32>
      %25 = tpu.matmul %23, %24, %cst_30 {dimension_numbers = #tpu.dot_dimension_numbers<[1], [0], [0], [1], [0, 0, 1, 1], [], []>} : vector<128x64xf32>, vector<64x32xf32>, vector<128x32xf32> -> vector<128x32xf32>
      %26 = vector.shape_cast %25 : vector<128x32xf32> to vector<16x8x32xf32>
      %27 = vector.shape_cast %22 : vector<8x32xf32> to vector<1x8x32xf32>
      %28 = vector.broadcast %27 : vector<1x8x32xf32> to vector<16x8x32xf32>
      %29 = arith.addf %26, %28 : vector<16x8x32xf32>
      %c0_31 = arith.constant 0 : index
      %c0_32 = arith.constant 0 : index
      %30 = vector.load %arg7[%c0_31, %c0_32] : memref<1x32xf32, #tpu.memory_space<vmem>>, vector<1x32xf32>
      %31 = vector.shape_cast %30 : vector<1x32xf32> to vector<1x1x32xf32>
      %32 = vector.broadcast %31 : vector<1x1x32xf32> to vector<16x8x32xf32>
      %33 = arith.addf %29, %32 : vector<16x8x32xf32>
      %34 = math.tanh %33 : vector<16x8x32xf32>
      %c0_33 = arith.constant 0 : index
      %c0_34 = arith.constant 0 : index
      %35 = vector.load %arg8[%c0_33, %c0_34] : memref<1x32xf32, #tpu.memory_space<vmem>>, vector<1x32xf32>
      %36 = vector.shape_cast %35 : vector<1x32xf32> to vector<1x1x32xf32>
      %37 = vector.broadcast %36 : vector<1x1x32xf32> to vector<16x8x32xf32>
      %38 = arith.mulf %34, %37 : vector<16x8x32xf32>
      %cst_35 = arith.constant dense<0.000000e+00> : vector<16x8xf32>
      %39 = vector.multi_reduction <add>, %38, %cst_35 [2] : vector<16x8x32xf32> to vector<16x8xf32>
      %c0_36 = arith.constant 0 : index
      %c0_37 = arith.constant 0 : index
      %40 = vector.load %arg4[%c0_36, %c0_37] : memref<16x8xf32, #tpu.memory_space<vmem>>, vector<16x8xf32>
      %cst_38 = arith.constant 5.000000e-01 : f32
      %41 = vector.broadcast %cst_38 : f32 to vector<16x8xf32>
      %42 = arith.cmpf ogt, %40, %41 : vector<16x8xf32>
      %cst_39 = arith.constant -1.000000e+06 : f32
      %43 = vector.broadcast %cst_39 : f32 to vector<16x8xf32>
      %44 = arith.select %42, %43, %39 : vector<16x8xi1>, vector<16x8xf32>
      %cst_40 = arith.constant dense<0xFF800000> : vector<8xf32>
      %45 = vector.multi_reduction <maximumf>, %44, %cst_40 [0] : vector<16x8xf32> to vector<8xf32>
      %46 = vector.shape_cast %45 : vector<8xf32> to vector<1x8xf32>
      %47 = vector.broadcast %46 : vector<1x8xf32> to vector<16x8xf32>
      %48 = arith.subf %44, %47 : vector<16x8xf32>
      %49 = math.exp %48 : vector<16x8xf32>
      %cst_41 = arith.constant dense<0.000000e+00> : vector<8xf32>
      %50 = vector.multi_reduction <add>, %49, %cst_41 [0] : vector<16x8xf32> to vector<8xf32>
      %51 = vector.shape_cast %50 : vector<8xf32> to vector<1x8xf32>
      %52 = tpu.reciprocal %51 {approx = true} : vector<1x8xf32> -> vector<1x8xf32>
      %53 = vector.broadcast %52 : vector<1x8xf32> to vector<16x8xf32>
      %54 = arith.mulf %49, %53 : vector<16x8xf32>
      %55 = vector.shape_cast %54 : vector<16x8xf32> to vector<16x8x1xf32>
      %56 = vector.broadcast %55 : vector<16x8x1xf32> to vector<16x8x64xf32>
      %57 = arith.mulf %56, %20 : vector<16x8x64xf32>
      %cst_42 = arith.constant dense<0.000000e+00> : vector<8x64xf32>
      %58 = vector.multi_reduction <add>, %57, %cst_42 [0] : vector<16x8x64xf32> to vector<8x64xf32>
      %c0_43 = arith.constant 0 : index
      %c0_44 = arith.constant 0 : index
      %59 = vector.load %arg9[%c0_43, %c0_44] : memref<32x96xf32, #tpu.memory_space<vmem>>, vector<32x96xf32>
      %cst_45 = arith.constant dense<0.000000e+00> : vector<8x96xf32>
      %60 = tpu.matmul %18, %59, %cst_45 {dimension_numbers = #tpu.dot_dimension_numbers<[1], [0], [0], [1], [0, 0, 1, 1], [], []>} : vector<8x32xf32>, vector<32x96xf32>, vector<8x96xf32> -> vector<8x96xf32>
      %c0_46 = arith.constant 0 : index
      %c0_47 = arith.constant 0 : index
      %61 = vector.load %arg10[%c0_46, %c0_47] : memref<64x96xf32, #tpu.memory_space<vmem>>, vector<64x96xf32>
      %cst_48 = arith.constant dense<0.000000e+00> : vector<8x96xf32>
      %62 = tpu.matmul %58, %61, %cst_48 {dimension_numbers = #tpu.dot_dimension_numbers<[1], [0], [0], [1], [0, 0, 1, 1], [], []>} : vector<8x64xf32>, vector<64x96xf32>, vector<8x96xf32> -> vector<8x96xf32>
      %63 = arith.addf %60, %62 : vector<8x96xf32>
      %c0_49 = arith.constant 0 : index
      %c0_50 = arith.constant 0 : index
      %64 = vector.load %arg12[%c0_49, %c0_50] : memref<1x96xf32, #tpu.memory_space<vmem>>, vector<1x96xf32>
      %65 = vector.broadcast %64 : vector<1x96xf32> to vector<8x96xf32>
      %66 = arith.addf %63, %65 : vector<8x96xf32>
      %c0_51 = arith.constant 0 : index
      %c0_52 = arith.constant 0 : index
      %67 = vector.load %arg11[%c0_51, %c0_52] : memref<32x96xf32, #tpu.memory_space<vmem>>, vector<32x96xf32>
      %cst_53 = arith.constant dense<0.000000e+00> : vector<8x96xf32>
      %68 = tpu.matmul %19, %67, %cst_53 {dimension_numbers = #tpu.dot_dimension_numbers<[1], [0], [0], [1], [0, 0, 1, 1], [], []>} : vector<8x32xf32>, vector<32x96xf32>, vector<8x96xf32> -> vector<8x96xf32>
      %c0_54 = arith.constant 0 : index
      %c0_55 = arith.constant 0 : index
      %69 = vector.load %arg13[%c0_54, %c0_55] : memref<1x96xf32, #tpu.memory_space<vmem>>, vector<1x96xf32>
      %70 = vector.broadcast %69 : vector<1x96xf32> to vector<8x96xf32>
      %71 = arith.addf %68, %70 : vector<8x96xf32>
      %72 = vector.extract_strided_slice %66 {offsets = [0, 0], sizes = [8, 32], strides = [1, 1]} : vector<8x96xf32> to vector<8x32xf32>
      %73 = vector.extract_strided_slice %71 {offsets = [0, 0], sizes = [8, 32], strides = [1, 1]} : vector<8x96xf32> to vector<8x32xf32>
      %74 = arith.addf %72, %73 : vector<8x32xf32>
      %75 = arith.negf %74 : vector<8x32xf32>
      %76 = math.exp %75 : vector<8x32xf32>
      %cst_56 = arith.constant 1.000000e+00 : f32
      %77 = vector.broadcast %cst_56 : f32 to vector<8x32xf32>
      %78 = arith.addf %77, %76 : vector<8x32xf32>
      %79 = arith.divf %77, %78 : vector<8x32xf32>
      %80 = vector.extract_strided_slice %66 {offsets = [0, 32], sizes = [8, 32], strides = [1, 1]} : vector<8x96xf32> to vector<8x32xf32>
      %81 = vector.extract_strided_slice %71 {offsets = [0, 32], sizes = [8, 32], strides = [1, 1]} : vector<8x96xf32> to vector<8x32xf32>
      %82 = arith.addf %80, %81 : vector<8x32xf32>
      %83 = arith.negf %82 : vector<8x32xf32>
      %84 = math.exp %83 : vector<8x32xf32>
      %cst_57 = arith.constant 1.000000e+00 : f32
      %85 = vector.broadcast %cst_57 : f32 to vector<8x32xf32>
      %86 = arith.addf %85, %84 : vector<8x32xf32>
      %87 = arith.divf %85, %86 : vector<8x32xf32>
      %88 = vector.extract_strided_slice %66 {offsets = [0, 64], sizes = [8, 32], strides = [1, 1]} : vector<8x96xf32> to vector<8x32xf32>
      %89 = vector.extract_strided_slice %71 {offsets = [0, 64], sizes = [8, 32], strides = [1, 1]} : vector<8x96xf32> to vector<8x32xf32>
      %90 = arith.mulf %79, %89 : vector<8x32xf32>
      %91 = arith.addf %88, %90 : vector<8x32xf32>
      %92 = math.tanh %91 : vector<8x32xf32>
      %cst_58 = arith.constant 1.000000e+00 : f32
      %93 = vector.broadcast %cst_58 : f32 to vector<8x32xf32>
      %94 = arith.subf %93, %87 : vector<8x32xf32>
      %95 = arith.mulf %94, %92 : vector<8x32xf32>
      %96 = arith.mulf %87, %19 : vector<8x32xf32>
      %97 = arith.addf %95, %96 : vector<8x32xf32>
      %c0_59 = arith.constant 0 : index
      %c0_60 = arith.constant 0 : index
      %98 = vector.load %arg21[%c0_59, %c0_60] : memref<8x32xf32, #tpu.memory_space<vmem>>, vector<8x32xf32>
      tpu.vector_store %arg21[%c0_59, %c0_60], %97 {strides = array<i32>} : memref<8x32xf32, #tpu.memory_space<vmem>>, vector<8x32xf32>,
      %c0_61 = arith.constant 0 : index
      %c0_62 = arith.constant 0 : index
      %99 = vector.load %arg22[%c0_61, %c0_62] : memref<8x64xf32, #tpu.memory_space<vmem>>, vector<8x64xf32>
      tpu.vector_store %arg22[%c0_61, %c0_62], %58 {strides = array<i32>} : memref<8x64xf32, #tpu.memory_space<vmem>>, vector<8x64xf32>,
      %c0_63 = arith.constant 0 : index
      %c0_64 = arith.constant 0 : index
      %100 = vector.load %arg19[%c0_63, %c0_64] : memref<8x32xf32, #tpu.memory_space<vmem>>, vector<8x32xf32>
      tpu.vector_store %arg19[%c0_63, %c0_64], %97 {strides = array<i32>} : memref<8x32xf32, #tpu.memory_space<vmem>>, vector<8x32xf32>,
      %c0_65 = arith.constant 0 : index
      %c0_66 = arith.constant 0 : index
      %101 = vector.load %arg20[%c0_65, %c0_66] : memref<16x8xf32, #tpu.memory_space<vmem>>, vector<16x8xf32>
      tpu.vector_store %arg20[%c0_65, %c0_66], %54 {strides = array<i32>} : memref<16x8xf32, #tpu.memory_space<vmem>>, vector<16x8xf32>,
    } else {
    }
    %c0 = arith.constant 0 : index
    %c0_1 = arith.constant 0 : index
    %3 = vector.load %arg21[%c0, %c0_1] : memref<8x32xf32, #tpu.memory_space<vmem>>, vector<8x32xf32>
    %c0_2 = arith.constant 0 : index
    %c0_3 = arith.constant 0 : index
    %4 = vector.load %arg14[%c0_2, %c0_3] : memref<32x128xf32, #tpu.memory_space<vmem>>, vector<32x128xf32>
    %cst = arith.constant dense<0.000000e+00> : vector<8x128xf32>
    %5 = tpu.matmul %3, %4, %cst {dimension_numbers = #tpu.dot_dimension_numbers<[1], [0], [0], [1], [0, 0, 1, 1], [], []>} : vector<8x32xf32>, vector<32x128xf32>, vector<8x128xf32> -> vector<8x128xf32>
    %c0_4 = arith.constant 0 : index
    %c0_5 = arith.constant 0 : index
    %6 = vector.load %arg22[%c0_4, %c0_5] : memref<8x64xf32, #tpu.memory_space<vmem>>, vector<8x64xf32>
    %c0_6 = arith.constant 0 : index
    %c0_7 = arith.constant 0 : index
    %7 = vector.load %arg15[%c0_6, %c0_7] : memref<64x128xf32, #tpu.memory_space<vmem>>, vector<64x128xf32>
    %cst_8 = arith.constant dense<0.000000e+00> : vector<8x128xf32>
    %8 = tpu.matmul %6, %7, %cst_8 {dimension_numbers = #tpu.dot_dimension_numbers<[1], [0], [0], [1], [0, 0, 1, 1], [], []>} : vector<8x64xf32>, vector<64x128xf32>, vector<8x128xf32> -> vector<8x128xf32>
    %9 = arith.addf %5, %8 : vector<8x128xf32>
    %c0_9 = arith.constant 0 : index
    %c0_10 = arith.constant 0 : index
    %10 = vector.load %arg1[%c0_9, %c0_10] : memref<8x32xf32, #tpu.memory_space<vmem>>, vector<8x32xf32>
    %c0_11 = arith.constant 0 : index
    %c0_12 = arith.constant 0 : index
    %11 = vector.load %arg16[%c0_11, %c0_12] : memref<32x128xf32, #tpu.memory_space<vmem>>, vector<32x128xf32>
    %cst_13 = arith.constant dense<0.000000e+00> : vector<8x128xf32>
    %12 = tpu.matmul %10, %11, %cst_13 {dimension_numbers = #tpu.dot_dimension_numbers<[1], [0], [0], [1], [0, 0, 1, 1], [], []>} : vector<8x32xf32>, vector<32x128xf32>, vector<8x128xf32> -> vector<8x128xf32>
    %13 = arith.addf %9, %12 : vector<8x128xf32>
    %c0_14 = arith.constant 0 : index
    %c0_15 = arith.constant 0 : index
    %14 = vector.load %arg17[%c0_14, %c0_15] : memref<1x128xf32, #tpu.memory_space<vmem>>, vector<1x128xf32>
    %15 = vector.broadcast %14 : vector<1x128xf32> to vector<8x128xf32>
    %16 = arith.addf %13, %15 : vector<8x128xf32>
    %c0_16 = arith.constant 0 : index
    %c0_17 = arith.constant 0 : index
    %17 = vector.load %arg18[%c0_16, %c0_17] : memref<8x128xf32, #tpu.memory_space<vmem>>, vector<8x128xf32>
    tpu.vector_store %arg18[%c0_16, %c0_17], %16 {strides = array<i32>} : memref<8x128xf32, #tpu.memory_space<vmem>>, vector<8x128xf32>,
    return
  }
  func.func @transform_0(%arg0: i32) -> (i32, i32) {
    %c0_i32 = arith.constant 0 : i32
    %c0_i32_0 = arith.constant 0 : i32
    %c0_i32_1 = arith.constant 0 : i32
    return %c0_i32, %c0_i32_0 : i32, i32
  }
  func.func @transform_1(%arg0: i32) -> (i32, i32) {
    %c0_i32 = arith.constant 0 : i32
    %c0_i32_0 = arith.constant 0 : i32
    %c0_i32_1 = arith.constant 0 : i32
    return %c0_i32, %c0_i32_0 : i32, i32
  }
  func.func @transform_2(%arg0: i32) -> (i32, i32, i32) {
    %c0_i32 = arith.constant 0 : i32
    %c0_i32_0 = arith.constant 0 : i32
    %c0_i32_1 = arith.constant 0 : i32
    %c0_i32_2 = arith.constant 0 : i32
    return %c0_i32, %c0_i32_0, %c0_i32_1 : i32, i32, i32
  }
  func.func @transform_3(%arg0: i32) -> (i32, i32) {
    %c0_i32 = arith.constant 0 : i32
    %c0_i32_0 = arith.constant 0 : i32
    %c0_i32_1 = arith.constant 0 : i32
    return %c0_i32, %c0_i32_0 : i32, i32
  }
  func.func @transform_4(%arg0: i32) -> (i32, i32) {
    %c0_i32 = arith.constant 0 : i32
    %c0_i32_0 = arith.constant 0 : i32
    %c0_i32_1 = arith.constant 0 : i32
    return %c0_i32, %c0_i32_0 : i32, i32
  }
  func.func @transform_5(%arg0: i32) -> (i32, i32) {
    %c0_i32 = arith.constant 0 : i32
    %c0_i32_0 = arith.constant 0 : i32
    %c0_i32_1 = arith.constant 0 : i32
    return %c0_i32, %c0_i32_0 : i32, i32
  }
  func.func @transform_6(%arg0: i32) -> (i32, i32) {
    %c0_i32 = arith.constant 0 : i32
    %c0_i32_0 = arith.constant 0 : i32
    %c0_i32_1 = arith.constant 0 : i32
    return %c0_i32, %c0_i32_0 : i32, i32
  }
  func.func @transform_7(%arg0: i32) -> (i32, i32) {
    %c0_i32 = arith.constant 0 : i32
    %c0_i32_0 = arith.constant 0 : i32
    %c0_i32_1 = arith.constant 0 : i32
    return %c0_i32, %c0_i32_0 : i32, i32
  }
  func.func @transform_8(%arg0: i32) -> (i32, i32) {
    %c0_i32 = arith.constant 0 : i32
    %c0_i32_0 = arith.constant 0 : i32
    %c0_i32_1 = arith.constant 0 : i32
    return %c0_i32, %c0_i32_0 : i32, i32
  }
  func.func @transform_9(%arg0: i32) -> (i32, i32) {
    %c0_i32 = arith.constant 0 : i32
    %c0_i32_0 = arith.constant 0 : i32
    %c0_i32_1 = arith.constant 0 : i32
    return %c0_i32, %c0_i32_0 : i32, i32
  }
  func.func @transform_10(%arg0: i32) -> (i32, i32) {
    %c0_i32 = arith.constant 0 : i32
    %c0_i32_0 = arith.constant 0 : i32
    %c0_i32_1 = arith.constant 0 : i32
    return %c0_i32, %c0_i32_0 : i32, i32
  }
  func.func @transform_11(%arg0: i32) -> (i32, i32) {
    %c0_i32 = arith.constant 0 : i32
    %c0_i32_0 = arith.constant 0 : i32
    %c0_i32_1 = arith.constant 0 : i32
    return %c0_i32, %c0_i32_0 : i32, i32
  }
  func.func @transform_12(%arg0: i32) -> (i32, i32) {
    %c0_i32 = arith.constant 0 : i32
    %c0_i32_0 = arith.constant 0 : i32
    %c0_i32_1 = arith.constant 0 : i32
    return %c0_i32, %c0_i32_0 : i32, i32
  }
  func.func @transform_13(%arg0: i32) -> (i32, i32) {
    %c0_i32 = arith.constant 0 : i32
    %c0_i32_0 = arith.constant 0 : i32
    return %c0_i32, %arg0 : i32, i32
  }
  func.func @transform_14(%arg0: i32) -> (i32, i32) {
    %c0_i32 = arith.constant 0 : i32
    %c0_i32_0 = arith.constant 0 : i32
    return %c0_i32, %arg0 : i32, i32
  }
  func.func @transform_15(%arg0: i32) -> (i32, i32) {
    %c0_i32 = arith.constant 0 : i32
    %c0_i32_0 = arith.constant 0 : i32
    return %c0_i32, %arg0 : i32, i32
  }
  func.func @transform_16(%arg0: i32) -> (i32, i32) {
    %c0_i32 = arith.constant 0 : i32
    %c0_i32_0 = arith.constant 0 : i32
    return %c0_i32, %arg0 : i32, i32
  }
  func.func @transform_17(%arg0: i32) -> (i32, i32) {
    %c0_i32 = arith.constant 0 : i32
    %c0_i32_0 = arith.constant 0 : i32
    return %c0_i32, %arg0 : i32, i32
  }
  func.func @transform_18(%arg0: i32) -> (i32, i32) {
    %c0_i32 = arith.constant 0 : i32
    %c0_i32_0 = arith.constant 0 : i32
    %c0_i32_1 = arith.constant 0 : i32
    return %c0_i32, %c0_i32_0 : i32, i32
  }
  func.func @transform_19(%arg0: i32) -> (i32, i32) {
    %c0_i32 = arith.constant 0 : i32
    %c0_i32_0 = arith.constant 0 : i32
    %c0_i32_1 = arith.constant 0 : i32
    return %c0_i32, %c0_i32_0 : i32, i32
  }
}

</mosaic_0001>

<llo_original>
// kernel: decoder_forward.1
$region0: #{decoder_forward.1}
  #allocation0 [shape = 'u32[]', space=smem, size = 0x4, offset = 0x4, fixed_abs, tag = 'smem constant byte address 0x4 - core index']
  #allocation1 [shape = 'u32[72,128]{1,0:T(1,128)}', space=vmem, size = 0x9000, scoped, tag = 'internal scratch']
  #allocation2 [shape = 'f32[8,32]{1,0:T(8,128)}', space=vmem, size = 0x1000, scoped, tag = 'scratch operand']
  #allocation3 [shape = 'f32[8,64]{1,0:T(8,128)}', space=vmem, size = 0x1000, scoped, tag = 'scratch operand']
  %s0 = inlined_call_operand.vmem [shape: f32[8,32], index: 0, kind: input, shape index: {}]
  %s1 = inlined_call_operand.vmem [shape: f32[8,32], index: 1, kind: input, shape index: {}]
  %s2 = inlined_call_operand.vmem [shape: f32[16,8,64], index: 2, kind: input, shape index: {}]
  %s3 = inlined_call_operand.vmem [shape: f32[16,8], index: 3, kind: input, shape index: {}]
  %s4 = inlined_call_operand.vmem [shape: f32[32,32], index: 4, kind: input, shape index: {}]
  %s5 = inlined_call_operand.vmem [shape: f32[64,32], index: 5, kind: input, shape index: {}]
  %s6 = inlined_call_operand.vmem [shape: f32[1,32], index: 6, kind: input, shape index: {}]
  %s7 = inlined_call_operand.vmem [shape: f32[1,32], index: 7, kind: input, shape index: {}]
  %s8 = inlined_call_operand.hbm [shape: f32[32,96], index: 8, kind: input, shape index: {}]
  %s9 = inlined_call_operand.vmem [shape: f32[64,96], index: 9, kind: input, shape index: {}]
  %s10 = inlined_call_operand.hbm [shape: f32[32,96], index: 10, kind: input, shape index: {}]
  %s11 = inlined_call_operand.vmem [shape: f32[1,96], index: 11, kind: input, shape index: {}]
  %s12 = inlined_call_operand.vmem [shape: f32[1,96], index: 12, kind: input, shape index: {}]
  %s13 = inlined_call_operand.vmem [shape: f32[32,256], index: 13, kind: input, shape index: {}]
  %s14 = inlined_call_operand.vmem [shape: f32[64,256], index: 14, kind: input, shape index: {}]
  %s15 = inlined_call_operand.vmem [shape: f32[32,256], index: 15, kind: input, shape index: {}]
  %s16 = inlined_call_operand.vmem [shape: f32[1,256], index: 16, kind: input, shape index: {}]
  %s17 = inlined_call_operand.hbm [shape: f32[8,256], index: 17, kind: output, shape index: {0}]
  %s18 = inlined_call_operand.hbm [shape: f32[8,32], index: 18, kind: output, shape index: {1}]
  %s19 = inlined_call_operand.vmem [shape: f32[16,8], index: 19, kind: output, shape index: {2}]
  %20 = xla_tuple %s17, %s18, %s19
  %s21 = sld [smem:[#allocation0]]
  $region243: #{decoder_forward.1} parent=0
    _
  %s23 = ssub.s32 1, %s21
  %s24 = scalar_select 0, %s23, %s21
  $region1: #{decoder_forward.1} parent=0
    #allocation4 [shape = 'u8[16384]{0}', space=vmem, size = 0x4000, scoped, tag = 'input window, operand 8, single buffered']
    #allocation5 [shape = 's32[2]{0}', space=sflag, size = 0x8, scoped, tag = 'scoped memory for decoder_forward.1']
    #allocation6 [shape = 's32[2]{0}', space=sflag, size = 0x8, scoped, tag = 'scoped memory for decoder_forward.1']
    #allocation7 [shape = 'u8[16384]{0}', space=vmem, size = 0x4000, scoped, tag = 'input window, operand 10, single buffered']
    #allocation8 [shape = 's32[1]{0}', space=sflag, size = 0x4, scoped, tag = 'scoped memory for decoder_forward.1']
    #allocation9 [shape = 'u8[32768]{0}', space=vmem, size = 0x8000, scoped, tag = 'input window, operand 13']
    #allocation10 [shape = 'u8[65536]{0}', space=vmem, size = 0x10000, scoped, tag = 'input window, operand 14']
    #allocation11 [shape = 'u8[32768]{0}', space=vmem, size = 0x8000, scoped, tag = 'input window, operand 15']
    #allocation12 [shape = 'u8[8192]{0}', space=vmem, size = 0x2000, scoped, tag = 'output window, operand 0']
    #allocation13 [shape = 'u8[4096]{0}', space=vmem, size = 0x1000, scoped, tag = 'output window, operand 1, single buffered']
    #allocation14 [shape = 's32[1]{0}', space=sflag, size = 0x4, scoped, tag = 'scoped memory for decoder_forward.1']
    %25 = vsyncpa [#allocation5], 0
    %26 = vsyncpa [#allocation8], 0
    %27 = vsyncpa [#allocation6], 0
    %s28 = scalar_lea.sflag [#allocation6], 1
    %29 = vsyncpa %s28, 0
    %30 = vsyncpa [#allocation14], 0
    loop: start=0, step=1, limit=4
    $region2: #{decoder_forward.1} parent=1 // loop_pre_header
      _
    $region3: #{decoder_forward.1} parent=1 // loop_header
      %s32 = sphi 0, %s36
      %p33 = scmp.ge.s32.totalorder %s32, 4
      %s40 = sphi 0, %s40
      %s42 = sphi 0, %s40
      %s43 = sphi 0, %s42
      %s57 = sphi 0, %s43
      %s61 = sphi 0, %s61
      %s63 = sphi 0, %s61
      %s64 = sphi 0, %s63
      %s78 = sphi 0, %s64
      %s82 = sphi 0, %s82
      %s84 = sphi 0, %s82
      %s85 = sphi 0, %s84
      %s99 = sphi 0, %s85
      %s103 = sphi 0, %s103
      %s105 = sphi 0, %s103
      %s106 = sphi 0, %s105
      %s120 = sphi 0, %s106
      %s124 = sphi 0, %s124
      %s126 = sphi 0, %s124
      %s127 = sphi 0, %s126
      %s141 = sphi 0, %s127
      %s145 = sphi 0, %s145
      %s147 = sphi 0, %s145
      %s148 = sphi 0, %s147
      %s162 = sphi 0, %s148
      %s166 = sphi 0, %s166
      %s168 = sphi 0, %s166
      %s169 = sphi 0, %s168
      %s183 = sphi 0, %s169
      %s187 = sphi 0, %s187
      %s189 = sphi 0, %s187
      %s190 = sphi 0, %s189
      %s204 = sphi 0, %s190
      %s208 = sphi 0, %s208
      %s210 = sphi 0, %s208
      %s211 = sphi 0, %s210
      %s225 = sphi 0, %s211
      %s229 = sphi 0, %s229
      %s231 = sphi 0, %s229
      %s232 = sphi 0, %s231
      %s246 = sphi 0, %s232
      %s250 = sphi 0, %s250
      %s252 = sphi 0, %s250
      %s253 = sphi 0, %s252
      %s267 = sphi 0, %s253
      %s271 = sphi 0, %s271
      %s273 = sphi 0, %s271
      %s274 = sphi 0, %s273
      %s288 = sphi 0, %s274
      %s292 = sphi 0, %s292
      %s294 = sphi 0, %s292
      %s295 = sphi 0, %s294
      %s309 = sphi 0, %s295
      %s315 = sphi 0, %s317
      %s318 = sphi 0, %s315
      %s319 = sphi 0, %s318
      %s335 = sphi 0, %s319
      %s341 = sphi 0, %s343
      %s344 = sphi 0, %s341
      %s345 = sphi 0, %s344
      %s361 = sphi 0, %s345
      %s367 = sphi 0, %s369
      %s370 = sphi 0, %s367
      %s371 = sphi 0, %s370
      %s387 = sphi 0, %s371
      %s393 = sphi 0, %s395
      %s396 = sphi 0, %s393
      %s397 = sphi 0, %s396
      %s413 = sphi 0, %s397
      %s419 = sphi 0, %s421
      %s422 = sphi 0, %s419
      %s423 = sphi 0, %s422
      %s439 = sphi 0, %s423
      %s443 = sphi 0, %s443
      %s445 = sphi 0, %s443
      %s446 = sphi 0, %s445
      %s460 = sphi 0, %s446
      %s464 = sphi 0, %s464
      %s466 = sphi 0, %s464
      %s467 = sphi 0, %s466
      %s481 = sphi 0, %s467
    $region4: #{decoder_forward.1} parent=1 // loop_header_branch
      %35 = sbr.rel (%p33) target = $region8
    $region5: #{decoder_forward.1} parent=1 // loop_body
      %s37 = ssub.s32 %s32, 1
      %s38 = ssub.s32 %s32, 2
      %s39 = sadd.s32 %s32, 1
      %s41 = sadd.s32 %s40, 1
      %p44 = scmp.eq.s32.totalorder %s32, 1
      %p45 = scmp.ne.s32.totalorder %s40, %s42
      %p46 = scmp.eq.s32.totalorder %s32, 0
      %p47 = por %p45, %p46
      %p48 = scmp.ne.s32.totalorder %s40, %s42
      %p49 = scmp.eq.s32.totalorder %s37, 1
      %p50 = por %p48, %p49
      %p51 = scmp.ne.s32.totalorder %s42, %s43
      %p52 = scmp.eq.s32.totalorder %s37, 0
      %p53 = por %p51, %p52
      %p54 = scmp.ne.s32.totalorder %s42, %s43
      %p55 = scmp.eq.s32.totalorder %s38, 1
      %p56 = por %p54, %p55
      %p58 = scmp.ne.s32.totalorder %s43, %s57
      %p59 = scmp.eq.s32.totalorder %s38, 0
      %p60 = por %p58, %p59
      %s62 = sadd.s32 %s61, 1
      %p65 = scmp.eq.s32.totalorder %s32, 1
      %p66 = scmp.ne.s32.totalorder %s61, %s63
      %p67 = scmp.eq.s32.totalorder %s32, 0
      %p68 = por %p66, %p67
      %p69 = scmp.ne.s32.totalorder %s61, %s63
      %p70 = scmp.eq.s32.totalorder %s37, 1
      %p71 = por %p69, %p70
      %p72 = scmp.ne.s32.totalorder %s63, %s64
      %p73 = scmp.eq.s32.totalorder %s37, 0
      %p74 = por %p72, %p73
      %p75 = scmp.ne.s32.totalorder %s63, %s64
      %p76 = scmp.eq.s32.totalorder %s38, 1
      %p77 = por %p75, %p76
      %p79 = scmp.ne.s32.totalorder %s64, %s78
      %p80 = scmp.eq.s32.totalorder %s38, 0
      %p81 = por %p79, %p80
      %s83 = sadd.s32 %s82, 1
      %p86 = scmp.eq.s32.totalorder %s32, 1
      %p87 = scmp.ne.s32.totalorder %s82, %s84
      %p88 = scmp.eq.s32.totalorder %s32, 0
      %p89 = por %p87, %p88
      %p90 = scmp.ne.s32.totalorder %s82, %s84
      %p91 = scmp.eq.s32.totalorder %s37, 1
      %p92 = por %p90, %p91
      %p93 = scmp.ne.s32.totalorder %s84, %s85
      %p94 = scmp.eq.s32.totalorder %s37, 0
      %p95 = por %p93, %p94
      %p96 = scmp.ne.s32.totalorder %s84, %s85
      %p97 = scmp.eq.s32.totalorder %s38, 1
      %p98 = por %p96, %p97
      %p100 = scmp.ne.s32.totalorder %s85, %s99
      %p101 = scmp.eq.s32.totalorder %s38, 0
      %p102 = por %p100, %p101
      %s104 = sadd.s32 %s103, 1
      %p107 = scmp.eq.s32.totalorder %s32, 1
      %p108 = scmp.ne.s32.totalorder %s103, %s105
      %p109 = scmp.eq.s32.totalorder %s32, 0
      %p110 = por %p108, %p109
      %p111 = scmp.ne.s32.totalorder %s103, %s105
      %p112 = scmp.eq.s32.totalorder %s37, 1
      %p113 = por %p111, %p112
      %p114 = scmp.ne.s32.totalorder %s105, %s106
      %p115 = scmp.eq.s32.totalorder %s37, 0
      %p116 = por %p114, %p115
      %p117 = scmp.ne.s32.totalorder %s105, %s106
      %p118 = scmp.eq.s32.totalorder %s38, 1
      %p119 = por %p117, %p118
      %p121 = scmp.ne.s32.totalorder %s106, %s120
      %p122 = scmp.eq.s32.totalorder %s38, 0
      %p123 = por %p121, %p122
      %s125 = sadd.s32 %s124, 1
      %p128 = scmp.eq.s32.totalorder %s32, 1
      %p129 = scmp.ne.s32.totalorder %s124, %s126
      %p130 = scmp.eq.s32.totalorder %s32, 0
      %p131 = por %p129, %p130
      %p132 = scmp.ne.s32.totalorder %s124, %s126
      %p133 = scmp.eq.s32.totalorder %s37, 1
      %p134 = por %p132, %p133
      %p135 = scmp.ne.s32.totalorder %s126, %s127
      %p136 = scmp.eq.s32.totalorder %s37, 0
      %p137 = por %p135, %p136
      %p138 = scmp.ne.s32.totalorder %s126, %s127
      %p139 = scmp.eq.s32.totalorder %s38, 1
      %p140 = por %p138, %p139
      %p142 = scmp.ne.s32.totalorder %s127, %s141
      %p143 = scmp.eq.s32.totalorder %s38, 0
      %p144 = por %p142, %p143
      %s146 = sadd.s32 %s145, 1
      %p149 = scmp.eq.s32.totalorder %s32, 1
      %p150 = scmp.ne.s32.totalorder %s145, %s147
      %p151 = scmp.eq.s32.totalorder %s32, 0
      %p152 = por %p150, %p151
      %p153 = scmp.ne.s32.totalorder %s145, %s147
      %p154 = scmp.eq.s32.totalorder %s37, 1
      %p155 = por %p153, %p154
      %p156 = scmp.ne.s32.totalorder %s147, %s148
      %p157 = scmp.eq.s32.totalorder %s37, 0
      %p158 = por %p156, %p157
      %p159 = scmp.ne.s32.totalorder %s147, %s148
      %p160 = scmp.eq.s32.totalorder %s38, 1
      %p161 = por %p159, %p160
      %p163 = scmp.ne.s32.totalorder %s148, %s162
      %p164 = scmp.eq.s32.totalorder %s38, 0
      %p165 = por %p163, %p164
      %s167 = sadd.s32 %s166, 1
      %p170 = scmp.eq.s32.totalorder %s32, 1
      %p171 = scmp.ne.s32.totalorder %s166, %s168
      %p172 = scmp.eq.s32.totalorder %s32, 0
      %p173 = por %p171, %p172
      %p174 = scmp.ne.s32.totalorder %s166, %s168
      %p175 = scmp.eq.s32.totalorder %s37, 1
      %p176 = por %p174, %p175
      %p177 = scmp.ne.s32.totalorder %s168, %s169
      %p178 = scmp.eq.s32.totalorder %s37, 0
      %p179 = por %p177, %p178
      %p180 = scmp.ne.s32.totalorder %s168, %s169
      %p181 = scmp.eq.s32.totalorder %s38, 1
      %p182 = por %p180, %p181
      %p184 = scmp.ne.s32.totalorder %s169, %s183
      %p185 = scmp.eq.s32.totalorder %s38, 0
      %p186 = por %p184, %p185
      %s188 = sadd.s32 %s187, 1
      %p191 = scmp.eq.s32.totalorder %s32, 1
      %p192 = scmp.ne.s32.totalorder %s187, %s189
      %p193 = scmp.eq.s32.totalorder %s32, 0
      %p194 = por %p192, %p193
      %p195 = scmp.ne.s32.totalorder %s187, %s189
      %p196 = scmp.eq.s32.totalorder %s37, 1
      %p197 = por %p195, %p196
      %p198 = scmp.ne.s32.totalorder %s189, %s190
      %p199 = scmp.eq.s32.totalorder %s37, 0
      %p200 = por %p198, %p199
      %p201 = scmp.ne.s32.totalorder %s189, %s190
      %p202 = scmp.eq.s32.totalorder %s38, 1
      %p203 = por %p201, %p202
      %p205 = scmp.ne.s32.totalorder %s190, %s204
      %p206 = scmp.eq.s32.totalorder %s38, 0
      %p207 = por %p205, %p206
      %s209 = sadd.s32 %s208, 1
      %p212 = scmp.eq.s32.totalorder %s32, 1
      %p213 = scmp.ne.s32.totalorder %s208, %s210
      %p214 = scmp.eq.s32.totalorder %s32, 0
      %p215 = por %p213, %p214
      %p216 = scmp.ne.s32.totalorder %s208, %s210
      %p217 = scmp.eq.s32.totalorder %s37, 1
      %p218 = por %p216, %p217
      %p219 = scmp.ne.s32.totalorder %s210, %s211
      %p220 = scmp.eq.s32.totalorder %s37, 0
      %p221 = por %p219, %p220
      %p222 = scmp.ne.s32.totalorder %s210, %s211
      %p223 = scmp.eq.s32.totalorder %s38, 1
      %p224 = por %p222, %p223
      %p226 = scmp.ne.s32.totalorder %s211, %s225
      %p227 = scmp.eq.s32.totalorder %s38, 0
      %p228 = por %p226, %p227
      %s230 = sadd.s32 %s229, 1
      %p233 = scmp.eq.s32.totalorder %s32, 1
      %p234 = scmp.ne.s32.totalorder %s229, %s231
      %p235 = scmp.eq.s32.totalorder %s32, 0
      %p236 = por %p234, %p235
      %p237 = scmp.ne.s32.totalorder %s229, %s231
      %p238 = scmp.eq.s32.totalorder %s37, 1
      %p239 = por %p237, %p238
      %p240 = scmp.ne.s32.totalorder %s231, %s232
      %p241 = scmp.eq.s32.totalorder %s37, 0
      %p242 = por %p240, %p241
      %p243 = scmp.ne.s32.totalorder %s231, %s232
      %p244 = scmp.eq.s32.totalorder %s38, 1
      %p245 = por %p243, %p244
      %p247 = scmp.ne.s32.totalorder %s232, %s246
      %p248 = scmp.eq.s32.totalorder %s38, 0
      %p249 = por %p247, %p248
      %s251 = sadd.s32 %s250, 1
      %p254 = scmp.eq.s32.totalorder %s32, 1
      %p255 = scmp.ne.s32.totalorder %s250, %s252
      %p256 = scmp.eq.s32.totalorder %s32, 0
      %p257 = por %p255, %p256
      %p258 = scmp.ne.s32.totalorder %s250, %s252
      %p259 = scmp.eq.s32.totalorder %s37, 1
      %p260 = por %p258, %p259
      %p261 = scmp.ne.s32.totalorder %s252, %s253
      %p262 = scmp.eq.s32.totalorder %s37, 0
      %p263 = por %p261, %p262
      %p264 = scmp.ne.s32.totalorder %s252, %s253
      %p265 = scmp.eq.s32.totalorder %s38, 1
      %p266 = por %p264, %p265
      %p268 = scmp.ne.s32.totalorder %s253, %s267
      %p269 = scmp.eq.s32.totalorder %s38, 0
      %p270 = por %p268, %p269
      %s272 = sadd.s32 %s271, 1
      %p275 = scmp.eq.s32.totalorder %s32, 1
      %p276 = scmp.ne.s32.totalorder %s271, %s273
      %p277 = scmp.eq.s32.totalorder %s32, 0
      %p278 = por %p276, %p277
      %p279 = scmp.ne.s32.totalorder %s271, %s273
      %p280 = scmp.eq.s32.totalorder %s37, 1
      %p281 = por %p279, %p280
      %p282 = scmp.ne.s32.totalorder %s273, %s274
      %p283 = scmp.eq.s32.totalorder %s37, 0
      %p284 = por %p282, %p283
      %p285 = scmp.ne.s32.totalorder %s273, %s274
      %p286 = scmp.eq.s32.totalorder %s38, 1
      %p287 = por %p285, %p286
      %p289 = scmp.ne.s32.totalorder %s274, %s288
      %p290 = scmp.eq.s32.totalorder %s38, 0
      %p291 = por %p289, %p290
      %s293 = sadd.s32 %s292, 1
      %p296 = scmp.eq.s32.totalorder %s32, 1
      %p297 = scmp.ne.s32.totalorder %s292, %s294
      %p298 = scmp.eq.s32.totalorder %s32, 0
      %p299 = por %p297, %p298
      %p300 = scmp.ne.s32.totalorder %s292, %s294
      %p301 = scmp.eq.s32.totalorder %s37, 1
      %p302 = por %p300, %p301
      %p303 = scmp.ne.s32.totalorder %s294, %s295
      %p304 = scmp.eq.s32.totalorder %s37, 0
      %p305 = por %p303, %p304
      %p306 = scmp.ne.s32.totalorder %s294, %s295
      %p307 = scmp.eq.s32.totalorder %s38, 1
      %p308 = por %p306, %p307
      %p310 = scmp.ne.s32.totalorder %s295, %s309
      %p311 = scmp.eq.s32.totalorder %s38, 0
      %p312 = por %p310, %p311
      %s313 = ssub.s32 %s32, %s39
      %p314 = scmp.eq.s32.totalorder %s313, 0
      %s316 = sadd.s32 %s315, 1
      %s317 = scalar_select %p314, %s315, %s316
      %p320 = pneg %p314
      %p321 = scmp.eq.s32.totalorder %s32, 1
      %p322 = por %p320, %p321
      %p323 = scmp.ne.s32.totalorder %s315, %s318
      %p324 = scmp.eq.s32.totalorder %s32, 0
      %p325 = por %p323, %p324
      %p326 = scmp.ne.s32.totalorder %s315, %s318
      %p327 = scmp.eq.s32.totalorder %s37, 1
      %p328 = por %p326, %p327
      %p329 = scmp.ne.s32.totalorder %s318, %s319
      %p330 = scmp.eq.s32.totalorder %s37, 0
      %p331 = por %p329, %p330
      %p332 = scmp.ne.s32.totalorder %s318, %s319
      %p333 = scmp.eq.s32.totalorder %s38, 1
      %p334 = por %p332, %p333
      %p336 = scmp.ne.s32.totalorder %s319, %s335
      %p337 = scmp.eq.s32.totalorder %s38, 0
      %p338 = por %p336, %p337
      %s339 = ssub.s32 %s32, %s39
      %p340 = scmp.eq.s32.totalorder %s339, 0
      %s342 = sadd.s32 %s341, 1
      %s343 = scalar_select %p340, %s341, %s342
      %p346 = pneg %p340
      %p347 = scmp.eq.s32.totalorder %s32, 1
      %p348 = por %p346, %p347
      %p349 = scmp.ne.s32.totalorder %s341, %s344
      %p350 = scmp.eq.s32.totalorder %s32, 0
      %p351 = por %p349, %p350
      %p352 = scmp.ne.s32.totalorder %s341, %s344
      %p353 = scmp.eq.s32.totalorder %s37, 1
      %p354 = por %p352, %p353
      %p355 = scmp.ne.s32.totalorder %s344, %s345
      %p356 = scmp.eq.s32.totalorder %s37, 0
      %p357 = por %p355, %p356
      %p358 = scmp.ne.s32.totalorder %s344, %s345
      %p359 = scmp.eq.s32.totalorder %s38, 1
      %p360 = por %p358, %p359
      %p362 = scmp.ne.s32.totalorder %s345, %s361
      %p363 = scmp.eq.s32.totalorder %s38, 0
      %p364 = por %p362, %p363
      %s365 = ssub.s32 %s32, %s39
      %p366 = scmp.eq.s32.totalorder %s365, 0
      %s368 = sadd.s32 %s367, 1
      %s369 = scalar_select %p366, %s367, %s368
      %p372 = pneg %p366
      %p373 = scmp.eq.s32.totalorder %s32, 1
      %p374 = por %p372, %p373
      %p375 = scmp.ne.s32.totalorder %s367, %s370
      %p376 = scmp.eq.s32.totalorder %s32, 0
      %p377 = por %p375, %p376
      %p378 = scmp.ne.s32.totalorder %s367, %s370
      %p379 = scmp.eq.s32.totalorder %s37, 1
      %p380 = por %p378, %p379
      %p381 = scmp.ne.s32.totalorder %s370, %s371
      %p382 = scmp.eq.s32.totalorder %s37, 0
      %p383 = por %p381, %p382
      %p384 = scmp.ne.s32.totalorder %s370, %s371
      %p385 = scmp.eq.s32.totalorder %s38, 1
      %p386 = por %p384, %p385
      %p388 = scmp.ne.s32.totalorder %s371, %s387
      %p389 = scmp.eq.s32.totalorder %s38, 0
      %p390 = por %p388, %p389
      %s391 = ssub.s32 %s32, %s39
      %p392 = scmp.eq.s32.totalorder %s391, 0
      %s394 = sadd.s32 %s393, 1
      %s395 = scalar_select %p392, %s393, %s394
      %p398 = pneg %p392
      %p399 = scmp.eq.s32.totalorder %s32, 1
      %p400 = por %p398, %p399
      %p401 = scmp.ne.s32.totalorder %s393, %s396
      %p402 = scmp.eq.s32.totalorder %s32, 0
      %p403 = por %p401, %p402
      %p404 = scmp.ne.s32.totalorder %s393, %s396
      %p405 = scmp.eq.s32.totalorder %s37, 1
      %p406 = por %p404, %p405
      %p407 = scmp.ne.s32.totalorder %s396, %s397
      %p408 = scmp.eq.s32.totalorder %s37, 0
      %p409 = por %p407, %p408
      %p410 = scmp.ne.s32.totalorder %s396, %s397
      %p411 = scmp.eq.s32.totalorder %s38, 1
      %p412 = por %p410, %p411
      %p414 = scmp.ne.s32.totalorder %s397, %s413
      %p415 = scmp.eq.s32.totalorder %s38, 0
      %p416 = por %p414, %p415
      %s417 = ssub.s32 %s32, %s39
      %p418 = scmp.eq.s32.totalorder %s417, 0
      %s420 = sadd.s32 %s419, 1
      %s421 = scalar_select %p418, %s419, %s420
      %p424 = pneg %p418
      %p425 = scmp.eq.s32.totalorder %s32, 1
      %p426 = por %p424, %p425
      %p427 = scmp.ne.s32.totalorder %s419, %s422
      %p428 = scmp.eq.s32.totalorder %s32, 0
      %p429 = por %p427, %p428
      %p430 = scmp.ne.s32.totalorder %s419, %s422
      %p431 = scmp.eq.s32.totalorder %s37, 1
      %p432 = por %p430, %p431
      %p433 = scmp.ne.s32.totalorder %s422, %s423
      %p434 = scmp.eq.s32.totalorder %s37, 0
      %p435 = por %p433, %p434
      %p436 = scmp.ne.s32.totalorder %s422, %s423
      %p437 = scmp.eq.s32.totalorder %s38, 1
      %p438 = por %p436, %p437
      %p440 = scmp.ne.s32.totalorder %s423, %s439
      %p441 = scmp.eq.s32.totalorder %s38, 0
      %p442 = por %p440, %p441
      %s444 = sadd.s32 %s443, 1
      %p447 = scmp.eq.s32.totalorder %s32, 1
      %p448 = scmp.ne.s32.totalorder %s443, %s445
      %p449 = scmp.eq.s32.totalorder %s32, 0
      %p450 = por %p448, %p449
      %p451 = scmp.ne.s32.totalorder %s443, %s445
      %p452 = scmp.eq.s32.totalorder %s37, 1
      %p453 = por %p451, %p452
      %p454 = scmp.ne.s32.totalorder %s445, %s446
      %p455 = scmp.eq.s32.totalorder %s37, 0
      %p456 = por %p454, %p455
      %p457 = scmp.ne.s32.totalorder %s445, %s446
      %p458 = scmp.eq.s32.totalorder %s38, 1
      %p459 = por %p457, %p458
      %p461 = scmp.ne.s32.totalorder %s446, %s460
      %p462 = scmp.eq.s32.totalorder %s38, 0
      %p463 = por %p461, %p462
      %s465 = sadd.s32 %s464, 1
      %p468 = scmp.eq.s32.totalorder %s32, 1
      %p469 = scmp.ne.s32.totalorder %s464, %s466
      %p470 = scmp.eq.s32.totalorder %s32, 0
      %p471 = por %p469, %p470
      %p472 = scmp.ne.s32.totalorder %s464, %s466
      %p473 = scmp.eq.s32.totalorder %s37, 1
      %p474 = por %p472, %p473
      %p475 = scmp.ne.s32.totalorder %s466, %s467
      %p476 = scmp.eq.s32.totalorder %s37, 0
      %p477 = por %p475, %p476
      %p478 = scmp.ne.s32.totalorder %s466, %s467
      %p479 = scmp.eq.s32.totalorder %s38, 1
      %p480 = por %p478, %p479
      %p482 = scmp.ne.s32.totalorder %s467, %s481
      %p483 = scmp.eq.s32.totalorder %s38, 0
      %p484 = por %p482, %p483
      %p485 = scmp.le.s32.totalorder 1, %s32
      %p486 = scmp.lt.s32.totalorder %s32, 3
      %p487 = pnand %p485, %p486
      %p488 = pneg %p487
      // Predicated region
      $region9: #{decoder_forward.1} parent=5 // pred_check
        _
      $region10: #{decoder_forward.1} parent=5 // pred_check_branch
        %490 = sbr.rel (%p487) target = $region12
      $region11: #{decoder_forward.1} parent=5 // pred_region
        %s491 = ssub.s32 %s32, 1
        // Predicated region
        $region13: #{decoder_forward.1} parent=11 // pred_check
          %p492 = pneg %p53
        $region14: #{decoder_forward.1} parent=11 // pred_check_branch
          %494 = sbr.rel (%p492) target = $region16
        $region15: #{decoder_forward.1} parent=11 // pred_region
          _
        $region16: #{decoder_forward.1} parent=11 // pred_fallthru
          _
        // Predicated region
        $region17: #{decoder_forward.1} parent=11 // pred_check
          %p495 = pneg %p74
        $region18: #{decoder_forward.1} parent=11 // pred_check_branch
          %497 = sbr.rel (%p495) target = $region20
        $region19: #{decoder_forward.1} parent=11 // pred_region
          _
        $region20: #{decoder_forward.1} parent=11 // pred_fallthru
          _
        // Predicated region
        $region21: #{decoder_forward.1} parent=11 // pred_check
          %p498 = pneg %p95
        $region22: #{decoder_forward.1} parent=11 // pred_check_branch
          %500 = sbr.rel (%p498) target = $region24
        $region23: #{decoder_forward.1} parent=11 // pred_region
          _
        $region24: #{decoder_forward.1} parent=11 // pred_fallthru
          _
        // Predicated region
        $region25: #{decoder_forward.1} parent=11 // pred_check
          %p501 = pneg %p116
        $region26: #{decoder_forward.1} parent=11 // pred_check_branch
          %503 = sbr.rel (%p501) target = $region28
        $region27: #{decoder_forward.1} parent=11 // pred_region
          _
        $region28: #{decoder_forward.1} parent=11 // pred_fallthru
          _
        // Predicated region
        $region29: #{decoder_forward.1} parent=11 // pred_check
          %p504 = pneg %p137
        $region30: #{decoder_forward.1} parent=11 // pred_check_branch
          %506 = sbr.rel (%p504) target = $region32
        $region31: #{decoder_forward.1} parent=11 // pred_region
          _
        $region32: #{decoder_forward.1} parent=11 // pred_fallthru
          _
        // Predicated region
        $region33: #{decoder_forward.1} parent=11 // pred_check
          %p507 = pneg %p158
        $region34: #{decoder_forward.1} parent=11 // pred_check_branch
          %509 = sbr.rel (%p507) target = $region36
        $region35: #{decoder_forward.1} parent=11 // pred_region
          _
        $region36: #{decoder_forward.1} parent=11 // pred_fallthru
          _
        // Predicated region
        $region37: #{decoder_forward.1} parent=11 // pred_check
          %p510 = pneg %p179
        $region38: #{decoder_forward.1} parent=11 // pred_check_branch
          %512 = sbr.rel (%p510) target = $region40
        $region39: #{decoder_forward.1} parent=11 // pred_region
          _
        $region40: #{decoder_forward.1} parent=11 // pred_fallthru
          _
        // Predicated region
        $region41: #{decoder_forward.1} parent=11 // pred_check
          %p513 = pneg %p200
        $region42: #{decoder_forward.1} parent=11 // pred_check_branch
          %515 = sbr.rel (%p513) target = $region44
        $region43: #{decoder_forward.1} parent=11 // pred_region
          _
        $region44: #{decoder_forward.1} parent=11 // pred_fallthru
          _
        // Predicated region
        $region45: #{decoder_forward.1} parent=11 // pred_check
          %p516 = pneg %p221
        $region46: #{decoder_forward.1} parent=11 // pred_check_branch
          %518 = sbr.rel (%p516) target = $region48
        $region47: #{decoder_forward.1} parent=11 // pred_region
          %520 = vsyncadd [#allocation5], 0
          %s521 = sshll.u32 %s8, 4
          %s522 = int_to_ptr.hbm [resolvable:$true] %s521
          %s523 = sshll.u32 [#allocation4], 4
          %s524 = int_to_ptr.vmem [resolvable:$true] %s523
          %529 = dma.hbm_to_vmem [thread:$0]  %s522, 512, %s524, [#allocation5], 128, 128, 8
        $region48: #{decoder_forward.1} parent=11 // pred_fallthru
          _
        // Predicated region
        $region49: #{decoder_forward.1} parent=11 // pred_check
          %p530 = pneg %p242
        $region50: #{decoder_forward.1} parent=11 // pred_check_branch
          %532 = sbr.rel (%p530) target = $region52
        $region51: #{decoder_forward.1} parent=11 // pred_region
          _
        $region52: #{decoder_forward.1} parent=11 // pred_fallthru
          _
        // Predicated region
        $region53: #{decoder_forward.1} parent=11 // pred_check
          %p533 = pneg %p263
        $region54: #{decoder_forward.1} parent=11 // pred_check_branch
          %535 = sbr.rel (%p533) target = $region56
        $region55: #{decoder_forward.1} parent=11 // pred_region
          %537 = vsyncadd [#allocation8], 0
          %s538 = sshll.u32 %s10, 4
          %s539 = int_to_ptr.hbm [resolvable:$true] %s538
          %s540 = sshll.u32 [#allocation7], 4
          %s541 = int_to_ptr.vmem [resolvable:$true] %s540
          %546 = dma.hbm_to_vmem [thread:$0]  %s539, 512, %s541, [#allocation8], 128, 128, 8
        $region56: #{decoder_forward.1} parent=11 // pred_fallthru
          _
        // Predicated region
        $region57: #{decoder_forward.1} parent=11 // pred_check
          %p547 = pneg %p284
        $region58: #{decoder_forward.1} parent=11 // pred_check_branch
          %549 = sbr.rel (%p547) target = $region60
        $region59: #{decoder_forward.1} parent=11 // pred_region
          _
        $region60: #{decoder_forward.1} parent=11 // pred_fallthru
          _
        // Predicated region
        $region61: #{decoder_forward.1} parent=11 // pred_check
          %p550 = pneg %p305
        $region62: #{decoder_forward.1} parent=11 // pred_check_branch
          %552 = sbr.rel (%p550) target = $region64
        $region63: #{decoder_forward.1} parent=11 // pred_region
          _
        $region64: #{decoder_forward.1} parent=11 // pred_fallthru
          _
      $region12: #{decoder_forward.1} parent=5 // pred_fallthru
        _
      %p553 = scmp.lt.s32.totalorder %s32, 2
      // Predicated region
      $region65: #{decoder_forward.1} parent=5 // pred_check
        %p554 = pneg %p553
      $region66: #{decoder_forward.1} parent=5 // pred_check_branch
        %556 = sbr.rel (%p554) target = $region68
      $region67: #{decoder_forward.1} parent=5 // pred_region
        // Predicated region
        $region69: #{decoder_forward.1} parent=67 // pred_check
          %p557 = pneg %p325
        $region70: #{decoder_forward.1} parent=67 // pred_check_branch
          %559 = sbr.rel (%p557) target = $region72
        $region71: #{decoder_forward.1} parent=67 // pred_region
          %s560 = sand.u32 %s315, 1
          %s561 = sand.u32 %s315, 1
          %s562 = smul.addr %s561, 32
          %s563 = scalar_lea.vmem [#allocation9], %s562
          %s564 = smul.addr %s32, 8
          %s565 = scalar_lea.vmem %s13, %s564
          // Predicated region
          $region73: #{decoder_forward.1} parent=71 // pred_check
            _
          $region74: #{decoder_forward.1} parent=71 // pred_check_branch
            %567 = sbr.rel (0) target = $region76
          $region75: #{decoder_forward.1} parent=71 // pred_region
            // Predicated region
            $region77: #{decoder_forward.1} parent=75 // pred_check
              _
            $region78: #{decoder_forward.1} parent=75 // pred_check_branch
              %569 = sbr.rel (0) target = $region80
            $region79: #{decoder_forward.1} parent=75 // pred_region
              // Predicated region
              $region92: #{decoder_forward.1} parent=79 // pred_check
                _
              $region93: #{decoder_forward.1} parent=79 // pred_check_branch
                %591 = sbr.rel (0) target = $region95
              $region94: #{decoder_forward.1} parent=79 // pred_region
                loop: start=0, step=1, limit=1
                $region96: #{decoder_forward.1} parent=94 // loop_pre_header
                  _
                $region97: #{decoder_forward.1} parent=94 // loop_header
                  %s593 = sphi 0, %s597
                  %p594 = scmp.ge.s32.totalorder %s593, 1
                  %s598 = sphi %s565, %s565
                  %s599 = sphi %s563, %s563
                $region98: #{decoder_forward.1} parent=94 // loop_header_branch
                  %596 = sbr.rel (%p594) target = $region102
                $region99: #{decoder_forward.1} parent=94 // loop_body
                  %v600 = vld [vmem:[%s598] sm:$0xff]
                  %601 = vst [vmem:[%s599] sm:$0xff] %v600
                  %v602 = vld [vmem:[%s598 + $0x10] sm:$0xff]
                  %603 = vst [vmem:[%s599 + $0x8] sm:$0xff] %v602
                  %v604 = vld [vmem:[%s598 + $0x20] sm:$0xff]
                  %605 = vst [vmem:[%s599 + $0x10] sm:$0xff] %v604
                  %v606 = vld [vmem:[%s598 + $0x30] sm:$0xff]
                  %607 = vst [vmem:[%s599 + $0x18] sm:$0xff] %v606
                $region100: #{decoder_forward.1} parent=94 // loop_footer
                  %s597 = sadd.s32 1, %s593
                $region101: #{decoder_forward.1} parent=94 // loop_footer_branch
                  %592 = sbr.rel target = $region97
                $region102: #{decoder_forward.1} parent=94 // loop_exit
                  _
              $region95: #{decoder_forward.1} parent=79 // pred_fallthru
                _
              // Predicated region
              $region103: #{decoder_forward.1} parent=79 // pred_check
                _
              $region104: #{decoder_forward.1} parent=79 // pred_check_branch
                %609 = sbr.rel target = $region106
              $region105: #{decoder_forward.1} parent=79 // pred_region
                _
              $region106: #{decoder_forward.1} parent=79 // pred_fallthru
                _
            $region80: #{decoder_forward.1} parent=75 // pred_fallthru
              _
            // Predicated region
            $region81: #{decoder_forward.1} parent=75 // pred_check
              _
            $region82: #{decoder_forward.1} parent=75 // pred_check_branch
              %571 = sbr.rel target = $region84
            $region83: #{decoder_forward.1} parent=75 // pred_region
              %s573 = ssub.s32 256, 1
              loop: start=0, step=1, limit=1
              $region85: #{decoder_forward.1} parent=83 // loop_pre_header
                _
              $region86: #{decoder_forward.1} parent=83 // loop_header
                %s575 = sphi 0, %s579
                %p576 = scmp.ge.s32.totalorder %s575, 1
                %s580 = sphi %s565, %s565
                %s581 = sphi %s563, %s563
              $region87: #{decoder_forward.1} parent=83 // loop_header_branch
                %578 = sbr.rel (%p576) target = $region91
              $region88: #{decoder_forward.1} parent=83 // loop_body
                %v582 = vld [vmem:[%s580] sm:%s573]
                %583 = vst [vmem:[%s581] sm:%s573] %v582
                %v584 = vld [vmem:[%s580 + $0x10] sm:%s573]
                %585 = vst [vmem:[%s581 + $0x8] sm:%s573] %v584
                %v586 = vld [vmem:[%s580 + $0x20] sm:%s573]
                %587 = vst [vmem:[%s581 + $0x10] sm:%s573] %v586
                %v588 = vld [vmem:[%s580 + $0x30] sm:%s573]
                %589 = vst [vmem:[%s581 + $0x18] sm:%s573] %v588
              $region89: #{decoder_forward.1} parent=83 // loop_footer
                %s579 = sadd.s32 1, %s575
              $region90: #{decoder_forward.1} parent=83 // loop_footer_branch
                %574 = sbr.rel target = $region86
              $region91: #{decoder_forward.1} parent=83 // loop_exit
                _
            $region84: #{decoder_forward.1} parent=75 // pred_fallthru
              _
          $region76: #{decoder_forward.1} parent=71 // pred_fallthru
            _
          %610 = vnop
        $region72: #{decoder_forward.1} parent=67 // pred_fallthru
          _
        // Predicated region
        $region107: #{decoder_forward.1} parent=67 // pred_check
          %p611 = pneg %p351
        $region108: #{decoder_forward.1} parent=67 // pred_check_branch
          %613 = sbr.rel (%p611) target = $region110
        $region109: #{decoder_forward.1} parent=67 // pred_region
          %s614 = sand.u32 %s341, 1
          %s615 = sand.u32 %s341, 1
          %s616 = smul.addr %s615, 64
          %s617 = scalar_lea.vmem [#allocation10], %s616
          %s618 = smul.addr %s32, 8
          %s619 = scalar_lea.vmem %s14, %s618
          // Predicated region
          $region111: #{decoder_forward.1} parent=109 // pred_check
            _
          $region112: #{decoder_forward.1} parent=109 // pred_check_branch
            %621 = sbr.rel (0) target = $region114
          $region113: #{decoder_forward.1} parent=109 // pred_region
            // Predicated region
            $region115: #{decoder_forward.1} parent=113 // pred_check
              _
            $region116: #{decoder_forward.1} parent=113 // pred_check_branch
              %623 = sbr.rel (0) target = $region118
            $region117: #{decoder_forward.1} parent=113 // pred_region
              // Predicated region
              $region130: #{decoder_forward.1} parent=117 // pred_check
                _
              $region131: #{decoder_forward.1} parent=117 // pred_check_branch
                %653 = sbr.rel (0) target = $region133
              $region132: #{decoder_forward.1} parent=117 // pred_region
                loop: start=0, step=1, limit=1
                $region134: #{decoder_forward.1} parent=132 // loop_pre_header
                  _
                $region135: #{decoder_forward.1} parent=132 // loop_header
                  %s655 = sphi 0, %s659
                  %p656 = scmp.ge.s32.totalorder %s655, 1
                  %s660 = sphi %s619, %s619
                  %s661 = sphi %s617, %s617
                $region136: #{decoder_forward.1} parent=132 // loop_header_branch
                  %658 = sbr.rel (%p656) target = $region140
                $region137: #{decoder_forward.1} parent=132 // loop_body
                  %v662 = vld [vmem:[%s660] sm:$0xff]
                  %663 = vst [vmem:[%s661] sm:$0xff] %v662
                  %v664 = vld [vmem:[%s660 + $0x10] sm:$0xff]
                  %665 = vst [vmem:[%s661 + $0x8] sm:$0xff] %v664
                  %v666 = vld [vmem:[%s660 + $0x20] sm:$0xff]
                  %667 = vst [vmem:[%s661 + $0x10] sm:$0xff] %v666
                  %v668 = vld [vmem:[%s660 + $0x30] sm:$0xff]
                  %669 = vst [vmem:[%s661 + $0x18] sm:$0xff] %v668
                  %v670 = vld [vmem:[%s660 + $0x40] sm:$0xff]
                  %671 = vst [vmem:[%s661 + $0x20] sm:$0xff] %v670
                  %v672 = vld [vmem:[%s660 + $0x50] sm:$0xff]
                  %673 = vst [vmem:[%s661 + $0x28] sm:$0xff] %v672
                  %v674 = vld [vmem:[%s660 + $0x60] sm:$0xff]
                  %675 = vst [vmem:[%s661 + $0x30] sm:$0xff] %v674
                  %v676 = vld [vmem:[%s660 + $0x70] sm:$0xff]
                  %677 = vst [vmem:[%s661 + $0x38] sm:$0xff] %v676
                $region138: #{decoder_forward.1} parent=132 // loop_footer
                  %s659 = sadd.s32 1, %s655
                $region139: #{decoder_forward.1} parent=132 // loop_footer_branch
                  %654 = sbr.rel target = $region135
                $region140: #{decoder_forward.1} parent=132 // loop_exit
                  _
              $region133: #{decoder_forward.1} parent=117 // pred_fallthru
                _
              // Predicated region
              $region141: #{decoder_forward.1} parent=117 // pred_check
                _
              $region142: #{decoder_forward.1} parent=117 // pred_check_branch
                %679 = sbr.rel target = $region144
              $region143: #{decoder_forward.1} parent=117 // pred_region
                _
              $region144: #{decoder_forward.1} parent=117 // pred_fallthru
                _
            $region118: #{decoder_forward.1} parent=113 // pred_fallthru
              _
            // Predicated region
            $region119: #{decoder_forward.1} parent=113 // pred_check
              _
            $region120: #{decoder_forward.1} parent=113 // pred_check_branch
              %625 = sbr.rel target = $region122
            $region121: #{decoder_forward.1} parent=113 // pred_region
              %s627 = ssub.s32 256, 1
              loop: start=0, step=1, limit=1
              $region123: #{decoder_forward.1} parent=121 // loop_pre_header
                _
              $region124: #{decoder_forward.1} parent=121 // loop_header
                %s629 = sphi 0, %s633
                %p630 = scmp.ge.s32.totalorder %s629, 1
                %s634 = sphi %s619, %s619
                %s635 = sphi %s617, %s617
              $region125: #{decoder_forward.1} parent=121 // loop_header_branch
                %632 = sbr.rel (%p630) target = $region129
              $region126: #{decoder_forward.1} parent=121 // loop_body
                %v636 = vld [vmem:[%s634] sm:%s627]
                %637 = vst [vmem:[%s635] sm:%s627] %v636
                %v638 = vld [vmem:[%s634 + $0x10] sm:%s627]
                %639 = vst [vmem:[%s635 + $0x8] sm:%s627] %v638
                %v640 = vld [vmem:[%s634 + $0x20] sm:%s627]
                %641 = vst [vmem:[%s635 + $0x10] sm:%s627] %v640
                %v642 = vld [vmem:[%s634 + $0x30] sm:%s627]
                %643 = vst [vmem:[%s635 + $0x18] sm:%s627] %v642
                %v644 = vld [vmem:[%s634 + $0x40] sm:%s627]
                %645 = vst [vmem:[%s635 + $0x20] sm:%s627] %v644
                %v646 = vld [vmem:[%s634 + $0x50] sm:%s627]
                %647 = vst [vmem:[%s635 + $0x28] sm:%s627] %v646
                %v648 = vld [vmem:[%s634 + $0x60] sm:%s627]
                %649 = vst [vmem:[%s635 + $0x30] sm:%s627] %v648
                %v650 = vld [vmem:[%s634 + $0x70] sm:%s627]
                %651 = vst [vmem:[%s635 + $0x38] sm:%s627] %v650
              $region127: #{decoder_forward.1} parent=121 // loop_footer
                %s633 = sadd.s32 1, %s629
              $region128: #{decoder_forward.1} parent=121 // loop_footer_branch
                %628 = sbr.rel target = $region124
              $region129: #{decoder_forward.1} parent=121 // loop_exit
                _
            $region122: #{decoder_forward.1} parent=113 // pred_fallthru
              _
          $region114: #{decoder_forward.1} parent=109 // pred_fallthru
            _
          %680 = vnop
        $region110: #{decoder_forward.1} parent=67 // pred_fallthru
          _
        // Predicated region
        $region145: #{decoder_forward.1} parent=67 // pred_check
          %p681 = pneg %p377
        $region146: #{decoder_forward.1} parent=67 // pred_check_branch
          %683 = sbr.rel (%p681) target = $region148
        $region147: #{decoder_forward.1} parent=67 // pred_region
          %s684 = sand.u32 %s367, 1
          %s685 = sand.u32 %s367, 1
          %s686 = smul.addr %s685, 32
          %s687 = scalar_lea.vmem [#allocation11], %s686
          %s688 = smul.addr %s32, 8
          %s689 = scalar_lea.vmem %s15, %s688
          // Predicated region
          $region149: #{decoder_forward.1} parent=147 // pred_check
            _
          $region150: #{decoder_forward.1} parent=147 // pred_check_branch
            %691 = sbr.rel (0) target = $region152
          $region151: #{decoder_forward.1} parent=147 // pred_region
            // Predicated region
            $region153: #{decoder_forward.1} parent=151 // pred_check
              _
            $region154: #{decoder_forward.1} parent=151 // pred_check_branch
              %693 = sbr.rel (0) target = $region156
            $region155: #{decoder_forward.1} parent=151 // pred_region
              // Predicated region
              $region168: #{decoder_forward.1} parent=155 // pred_check
                _
              $region169: #{decoder_forward.1} parent=155 // pred_check_branch
                %715 = sbr.rel (0) target = $region171
              $region170: #{decoder_forward.1} parent=155 // pred_region
                loop: start=0, step=1, limit=1
                $region172: #{decoder_forward.1} parent=170 // loop_pre_header
                  _
                $region173: #{decoder_forward.1} parent=170 // loop_header
                  %s717 = sphi 0, %s721
                  %p718 = scmp.ge.s32.totalorder %s717, 1
                  %s722 = sphi %s689, %s689
                  %s723 = sphi %s687, %s687
                $region174: #{decoder_forward.1} parent=170 // loop_header_branch
                  %720 = sbr.rel (%p718) target = $region178
                $region175: #{decoder_forward.1} parent=170 // loop_body
                  %v724 = vld [vmem:[%s722] sm:$0xff]
                  %725 = vst [vmem:[%s723] sm:$0xff] %v724
                  %v726 = vld [vmem:[%s722 + $0x10] sm:$0xff]
                  %727 = vst [vmem:[%s723 + $0x8] sm:$0xff] %v726
                  %v728 = vld [vmem:[%s722 + $0x20] sm:$0xff]
                  %729 = vst [vmem:[%s723 + $0x10] sm:$0xff] %v728
                  %v730 = vld [vmem:[%s722 + $0x30] sm:$0xff]
                  %731 = vst [vmem:[%s723 + $0x18] sm:$0xff] %v730
                $region176: #{decoder_forward.1} parent=170 // loop_footer
                  %s721 = sadd.s32 1, %s717
                $region177: #{decoder_forward.1} parent=170 // loop_footer_branch
                  %716 = sbr.rel target = $region173
                $region178: #{decoder_forward.1} parent=170 // loop_exit
                  _
              $region171: #{decoder_forward.1} parent=155 // pred_fallthru
                _
              // Predicated region
              $region179: #{decoder_forward.1} parent=155 // pred_check
                _
              $region180: #{decoder_forward.1} parent=155 // pred_check_branch
                %733 = sbr.rel target = $region182
              $region181: #{decoder_forward.1} parent=155 // pred_region
                _
              $region182: #{decoder_forward.1} parent=155 // pred_fallthru
                _
            $region156: #{decoder_forward.1} parent=151 // pred_fallthru
              _
            // Predicated region
            $region157: #{decoder_forward.1} parent=151 // pred_check
              _
            $region158: #{decoder_forward.1} parent=151 // pred_check_branch
              %695 = sbr.rel target = $region160
            $region159: #{decoder_forward.1} parent=151 // pred_region
              %s697 = ssub.s32 256, 1
              loop: start=0, step=1, limit=1
              $region161: #{decoder_forward.1} parent=159 // loop_pre_header
                _
              $region162: #{decoder_forward.1} parent=159 // loop_header
                %s699 = sphi 0, %s703
                %p700 = scmp.ge.s32.totalorder %s699, 1
                %s704 = sphi %s689, %s689
                %s705 = sphi %s687, %s687
              $region163: #{decoder_forward.1} parent=159 // loop_header_branch
                %702 = sbr.rel (%p700) target = $region167
              $region164: #{decoder_forward.1} parent=159 // loop_body
                %v706 = vld [vmem:[%s704] sm:%s697]
                %707 = vst [vmem:[%s705] sm:%s697] %v706
                %v708 = vld [vmem:[%s704 + $0x10] sm:%s697]
                %709 = vst [vmem:[%s705 + $0x8] sm:%s697] %v708
                %v710 = vld [vmem:[%s704 + $0x20] sm:%s697]
                %711 = vst [vmem:[%s705 + $0x10] sm:%s697] %v710
                %v712 = vld [vmem:[%s704 + $0x30] sm:%s697]
                %713 = vst [vmem:[%s705 + $0x18] sm:%s697] %v712
              $region165: #{decoder_forward.1} parent=159 // loop_footer
                %s703 = sadd.s32 1, %s699
              $region166: #{decoder_forward.1} parent=159 // loop_footer_branch
                %698 = sbr.rel target = $region162
              $region167: #{decoder_forward.1} parent=159 // loop_exit
                _
            $region160: #{decoder_forward.1} parent=151 // pred_fallthru
              _
          $region152: #{decoder_forward.1} parent=147 // pred_fallthru
            _
          %734 = vnop
        $region148: #{decoder_forward.1} parent=67 // pred_fallthru
          _
        // Predicated region
        $region183: #{decoder_forward.1} parent=67 // pred_check
          %p735 = pneg %p403
        $region184: #{decoder_forward.1} parent=67 // pred_check_branch
          %737 = sbr.rel (%p735) target = $region186
        $region185: #{decoder_forward.1} parent=67 // pred_region
          %p738 = scmp.lt.s32.totalorder %s32, 1
          %s739 = scalar_select %p738, %s32, 1
          %s740 = scalar_lea.vmem %s16, %s739
        $region186: #{decoder_forward.1} parent=67 // pred_fallthru
          _
      $region68: #{decoder_forward.1} parent=5 // pred_fallthru
        _
      %p741 = scmp.le.s32.totalorder 1, %s32
      %p742 = scmp.lt.s32.totalorder %s32, 3
      %p743 = pnand %p741, %p742
      %p744 = pneg %p743
      // Predicated region
      $region187: #{decoder_forward.1} parent=5 // pred_check
        _
      $region188: #{decoder_forward.1} parent=5 // pred_check_branch
        %746 = sbr.rel (%p743) target = $region190
      $region189: #{decoder_forward.1} parent=5 // pred_region
        %s747 = ssub.s32 %s32, 1
        // Predicated region
        $region191: #{decoder_forward.1} parent=189 // pred_check
          %p748 = pneg %p221
        $region192: #{decoder_forward.1} parent=189 // pred_check_branch
          %750 = sbr.rel (%p748) target = $region194
        $region193: #{decoder_forward.1} parent=189 // pred_region
          %752 = dma.done [#allocation5], 512
        $region194: #{decoder_forward.1} parent=189 // pred_fallthru
          _
        // Predicated region
        $region195: #{decoder_forward.1} parent=189 // pred_check
          %p753 = pneg %p263
        $region196: #{decoder_forward.1} parent=189 // pred_check_branch
          %755 = sbr.rel (%p753) target = $region198
        $region197: #{decoder_forward.1} parent=189 // pred_region
          %757 = dma.done [#allocation8], 512
        $region198: #{decoder_forward.1} parent=189 // pred_fallthru
          _
        %s758 = sand.u32 %s318, 1
        %s759 = sand.u32 %s318, 1
        %s760 = smul.addr %s759, 32
        %s761 = scalar_lea.vmem [#allocation9], %s760
        // Predicated region
        $region199: #{decoder_forward.1} parent=189 // pred_check
          %p762 = pneg %p331
        $region200: #{decoder_forward.1} parent=189 // pred_check_branch
          %764 = sbr.rel (%p762) target = $region202
        $region201: #{decoder_forward.1} parent=189 // pred_region
          _
        $region202: #{decoder_forward.1} parent=189 // pred_fallthru
          _
        %s765 = sand.u32 %s344, 1
        %s766 = sand.u32 %s344, 1
        %s767 = smul.addr %s766, 64
        %s768 = scalar_lea.vmem [#allocation10], %s767
        // Predicated region
        $region203: #{decoder_forward.1} parent=189 // pred_check
          %p769 = pneg %p357
        $region204: #{decoder_forward.1} parent=189 // pred_check_branch
          %771 = sbr.rel (%p769) target = $region206
        $region205: #{decoder_forward.1} parent=189 // pred_region
          _
        $region206: #{decoder_forward.1} parent=189 // pred_fallthru
          _
        %s772 = sand.u32 %s370, 1
        %s773 = sand.u32 %s370, 1
        %s774 = smul.addr %s773, 32
        %s775 = scalar_lea.vmem [#allocation11], %s774
        // Predicated region
        $region207: #{decoder_forward.1} parent=189 // pred_check
          %p776 = pneg %p383
        $region208: #{decoder_forward.1} parent=189 // pred_check_branch
          %778 = sbr.rel (%p776) target = $region210
        $region209: #{decoder_forward.1} parent=189 // pred_region
          _
        $region210: #{decoder_forward.1} parent=189 // pred_fallthru
          _
        %p779 = pneg %p53
        %p780 = pneg %p50
        %p781 = pneg %p74
        %p782 = pneg %p71
        %p783 = pneg %p95
        %p784 = pneg %p92
        %p785 = pneg %p116
        %p786 = pneg %p113
        %p787 = pneg %p137
        %p788 = pneg %p134
        %p789 = pneg %p158
        %p790 = pneg %p155
        %p791 = pneg %p179
        %p792 = pneg %p176
        %p793 = pneg %p200
        %p794 = pneg %p197
        %p795 = pneg %p221
        %p796 = pneg %p218
        %p797 = pneg %p242
        %p798 = pneg %p239
        %p799 = pneg %p263
        %p800 = pneg %p260
        %p801 = pneg %p284
        %p802 = pneg %p281
        %p803 = pneg %p305
        %p804 = pneg %p302
        %s805 = sand.u32 %s318, 1
        %s806 = sand.u32 %s318, 1
        %s807 = smul.addr %s806, 32
        %s808 = scalar_lea.vmem [#allocation9], %s807
        %p809 = pneg %p331
        %p810 = pneg %p328
        %s811 = sand.u32 %s344, 1
        %s812 = sand.u32 %s344, 1
        %s813 = smul.addr %s812, 64
        %s814 = scalar_lea.vmem [#allocation10], %s813
        %p815 = pneg %p357
        %p816 = pneg %p354
        %s817 = sand.u32 %s370, 1
        %s818 = sand.u32 %s370, 1
        %s819 = smul.addr %s818, 32
        %s820 = scalar_lea.vmem [#allocation11], %s819
        %p821 = pneg %p383
        %p822 = pneg %p380
        %p823 = scmp.lt.s32.totalorder %s37, 1
        %s824 = scalar_select %p823, %s37, 1
        %s825 = scalar_lea.vmem %s16, %s824
        %p826 = pneg %p409
        %p827 = pneg %p406
        %p828 = pneg %p435
        %p829 = pneg %p432
        %s830 = sand.u32 %s422, 1
        %s831 = scalar_lea.sflag [#allocation6], %s830
        %s832 = sand.u32 %s422, 1
        %s833 = smul.addr %s832, 8
        %s834 = scalar_lea.vmem [#allocation12], %s833
        %p835 = pneg %p456
        %p836 = pneg %p453
        %p837 = pneg %p477
        %p838 = pneg %p474
        %p839 = scmp.lt.s32.totalorder %s37, 1
        %s840 = scalar_select %p839, %s37, 1
        %s841 = scalar_lea.vmem %s16, %s840
        %p842 = scmp.eq.s32.totalorder %s37, 0
        // Predicated region
        $region211: #{decoder_forward.1} parent=189 // pred_check
          %p843 = pneg %p842
        $region212: #{decoder_forward.1} parent=189 // pred_check_branch
          %845 = sbr.rel (%p843) target = $region214
        $region213: #{decoder_forward.1} parent=189 // pred_region
          %v846 = vld [vmem:[%s0] sm:$0xff]
          %v847 = vld [vmem:[%s1] sm:$0xff]
          %v848 = vld [vmem:[%s2] sm:$0xff]
          %v849 = vld [vmem:[%s2 + $0x8] sm:$0xff]
          %v850 = vld [vmem:[%s2 + $0x10] sm:$0xff]
          %v851 = vld [vmem:[%s2 + $0x18] sm:$0xff]
          %v852 = vld [vmem:[%s2 + $0x20] sm:$0xff]
          %v853 = vld [vmem:[%s2 + $0x28] sm:$0xff]
          %v854 = vld [vmem:[%s2 + $0x30] sm:$0xff]
          %v855 = vld [vmem:[%s2 + $0x38] sm:$0xff]
          %v856 = vld [vmem:[%s2 + $0x40] sm:$0xff]
          %v857 = vld [vmem:[%s2 + $0x48] sm:$0xff]
          %v858 = vld [vmem:[%s2 + $0x50] sm:$0xff]
          %v859 = vld [vmem:[%s2 + $0x58] sm:$0xff]
          %v860 = vld [vmem:[%s2 + $0x60] sm:$0xff]
          %v861 = vld [vmem:[%s2 + $0x68] sm:$0xff]
          %v862 = vld [vmem:[%s2 + $0x70] sm:$0xff]
          %v863 = vld [vmem:[%s2 + $0x78] sm:$0xff]
          %v864 = vld [vmem:[%s4] sm:$0xff]
          %v865 = vld [vmem:[%s4 + $0x8] sm:$0xff]
          %v866 = vld [vmem:[%s4 + $0x10] sm:$0xff]
          %v867 = vld [vmem:[%s4 + $0x18] sm:$0xff]
          %vm868 = vcmask 261120
          %v870 = vsel %vm868, %v847, 0
          %872 = vmatpush.msra.mxu0 0.0
          %873 = vmatpush.msra.mxu0 0.0
          %874 = vmatpush.msra.mxu0 0.0
          %875 = vmatpush.msra.mxu0 0.0
          %876 = vmatpush.msra.mxu0 0.0
          %877 = vmatpush.msra.mxu0 0.0
          %878 = vmatpush.msra.mxu0 0.0
          %879 = vmatpush.msra.mxu0 0.0
          %880 = vmatpush.msra.mxu0 0.0
          %881 = vmatpush.msra.mxu0 0.0
          %882 = vmatpush.msra.mxu0 0.0
          %883 = vmatpush.msra.mxu0 0.0
          %884 = vmatpush.msra.mxu0 %v867
          %885 = vmatpush.msra.mxu0 %v866
          %886 = vmatpush.msra.mxu0 %v865
          %887 = vmatpush.msra.mxu0 %v864
          %888 = vmatmul.f32.gmra.mxu0 %v870
          %v889 = vpop.f32.mrf.mxu0
          %v890 = vadd.f32 0.0, %v889
          %891 = vdwg.mxu0
          %v892 = vld [vmem:[%s5] sm:$0xff]
          %v893 = vld [vmem:[%s5 + $0x8] sm:$0xff]
          %v894 = vld [vmem:[%s5 + $0x10] sm:$0xff]
          %v895 = vld [vmem:[%s5 + $0x18] sm:$0xff]
          %v896 = vld [vmem:[%s5 + $0x20] sm:$0xff]
          %v897 = vld [vmem:[%s5 + $0x28] sm:$0xff]
          %v898 = vld [vmem:[%s5 + $0x30] sm:$0xff]
          %v899 = vld [vmem:[%s5 + $0x38] sm:$0xff]
          %vm900 = vcmask 523264
          %v902 = vsel %vm900, %v848, 0
          %v905 = vsel %vm900, %v849, 0
          %v908 = vsel %vm900, %v850, 0
          %v911 = vsel %vm900, %v851, 0
          %v914 = vsel %vm900, %v852, 0
          %v917 = vsel %vm900, %v853, 0
          %v920 = vsel %vm900, %v854, 0
          %v923 = vsel %vm900, %v855, 0
          %v926 = vsel %vm900, %v856, 0
          %v929 = vsel %vm900, %v857, 0
          %v932 = vsel %vm900, %v858, 0
          %v935 = vsel %vm900, %v859, 0
          %v938 = vsel %vm900, %v860, 0
          %v941 = vsel %vm900, %v861, 0
          %v944 = vsel %vm900, %v862, 0
          %v947 = vsel %vm900, %v863, 0
          %949 = vmatpush.msra.mxu0 0.0
          %950 = vmatpush.msra.mxu0 0.0
          %951 = vmatpush.msra.mxu0 0.0
          %952 = vmatpush.msra.mxu0 0.0
          %953 = vmatpush.msra.mxu0 0.0
          %954 = vmatpush.msra.mxu0 0.0
          %955 = vmatpush.msra.mxu0 0.0
          %956 = vmatpush.msra.mxu0 0.0
          %957 = vmatpush.msra.mxu0 %v899
          %958 = vmatpush.msra.mxu0 %v898
          %959 = vmatpush.msra.mxu0 %v897
          %960 = vmatpush.msra.mxu0 %v896
          %961 = vmatpush.msra.mxu0 %v895
          %962 = vmatpush.msra.mxu0 %v894
          %963 = vmatpush.msra.mxu0 %v893
          %964 = vmatpush.msra.mxu0 %v892
          %965 = vmatmul.f32.gmra.mxu0 %v902
          %v966 = vpop.f32.mrf.mxu0
          %v967 = vadd.f32 0.0, %v966
          %968 = vmatmul.f32.gmra.mxu0 %v905
          %v969 = vpop.f32.mrf.mxu0
          %v970 = vadd.f32 0.0, %v969
          %971 = vmatmul.f32.gmra.mxu0 %v908
          %v972 = vpop.f32.mrf.mxu0
          %v973 = vadd.f32 0.0, %v972
          %974 = vmatmul.f32.gmra.mxu0 %v911
          %v975 = vpop.f32.mrf.mxu0
          %v976 = vadd.f32 0.0, %v975
          %977 = vmatmul.f32.gmra.mxu0 %v914
          %v978 = vpop.f32.mrf.mxu0
          %v979 = vadd.f32 0.0, %v978
          %980 = vmatmul.f32.gmra.mxu0 %v917
          %v981 = vpop.f32.mrf.mxu0
          %v982 = vadd.f32 0.0, %v981
          %983 = vmatmul.f32.gmra.mxu0 %v920
          %v984 = vpop.f32.mrf.mxu0
          %v985 = vadd.f32 0.0, %v984
          %986 = vmatmul.f32.gmra.mxu0 %v923
          %v987 = vpop.f32.mrf.mxu0
          %v988 = vadd.f32 0.0, %v987
          %989 = vmatmul.f32.gmra.mxu0 %v926
          %v990 = vpop.f32.mrf.mxu0
          %v991 = vadd.f32 0.0, %v990
          %992 = vmatmul.f32.gmra.mxu0 %v929
          %v993 = vpop.f32.mrf.mxu0
          %v994 = vadd.f32 0.0, %v993
          %995 = vmatmul.f32.gmra.mxu0 %v932
          %v996 = vpop.f32.mrf.mxu0
          %v997 = vadd.f32 0.0, %v996
          %998 = vmatmul.f32.gmra.mxu0 %v935
          %v999 = vpop.f32.mrf.mxu0
          %v1000 = vadd.f32 0.0, %v999
          %1001 = vmatmul.f32.gmra.mxu0 %v938
          %v1002 = vpop.f32.mrf.mxu0
          %v1003 = vadd.f32 0.0, %v1002
          %1004 = vmatmul.f32.gmra.mxu0 %v941
          %v1005 = vpop.f32.mrf.mxu0
          %v1006 = vadd.f32 0.0, %v1005
          %1007 = vmatmul.f32.gmra.mxu0 %v944
          %v1008 = vpop.f32.mrf.mxu0
          %v1009 = vadd.f32 0.0, %v1008
          %1010 = vmatmul.f32.gmra.mxu0 %v947
          %v1011 = vpop.f32.mrf.mxu0
          %v1012 = vadd.f32 0.0, %v1011
          %1013 = vdwg.mxu0
          %v1014 = vadd.f32 %v967, %v890
          %v1015 = vadd.f32 %v970, %v890
          %v1016 = vadd.f32 %v973, %v890
          %v1017 = vadd.f32 %v976, %v890
          %v1018 = vadd.f32 %v979, %v890
          %v1019 = vadd.f32 %v982, %v890
          %v1020 = vadd.f32 %v985, %v890
          %v1021 = vadd.f32 %v988, %v890
          %v1022 = vadd.f32 %v991, %v890
          %v1023 = vadd.f32 %v994, %v890
          %v1024 = vadd.f32 %v997, %v890
          %v1025 = vadd.f32 %v1000, %v890
          %v1026 = vadd.f32 %v1003, %v890
          %v1027 = vadd.f32 %v1006, %v890
          %v1028 = vadd.f32 %v1009, %v890
          %v1029 = vadd.f32 %v1012, %v890
          %v1030 = vld [vmem:[%s6] sm:$0x1]
          %v1032 = vperm.slane %v1030, 0
          %v1034 = vadd.f32 %v1014, %v1032
          %v1035 = vadd.f32 %v1015, %v1032
          %v1036 = vadd.f32 %v1016, %v1032
          %v1037 = vadd.f32 %v1017, %v1032
          %v1038 = vadd.f32 %v1018, %v1032
          %v1039 = vadd.f32 %v1019, %v1032
          %v1040 = vadd.f32 %v1020, %v1032
          %v1041 = vadd.f32 %v1021, %v1032
          %v1042 = vadd.f32 %v1022, %v1032
          %v1043 = vadd.f32 %v1023, %v1032
          %v1044 = vadd.f32 %v1024, %v1032
          %v1045 = vadd.f32 %v1025, %v1032
          %v1046 = vadd.f32 %v1026, %v1032
          %v1047 = vadd.f32 %v1027, %v1032
          %v1048 = vadd.f32 %v1028, %v1032
          %v1049 = vadd.f32 %v1029, %v1032
          %v1050 = vtanh.pop %v1034
          %v1051 = vtanh.pop %v1035
          %v1052 = vtanh.pop %v1036
          %v1053 = vtanh.pop %v1037
          %v1054 = vtanh.pop %v1038
          %v1055 = vtanh.pop %v1039
          %v1056 = vtanh.pop %v1040
          %v1057 = vtanh.pop %v1041
          %v1058 = vtanh.pop %v1042
          %v1059 = vtanh.pop %v1043
          %v1060 = vtanh.pop %v1044
          %v1061 = vtanh.pop %v1045
          %v1062 = vtanh.pop %v1046
          %v1063 = vtanh.pop %v1047
          %v1064 = vtanh.pop %v1048
          %v1065 = vtanh.pop %v1049
          %v1066 = vld [vmem:[%s7] sm:$0x1]
          %v1068 = vperm.slane %v1066, 0
          %v1070 = vmul.f32 %v1050, %v1068
          %v1071 = vmul.f32 %v1051, %v1068
          %v1072 = vmul.f32 %v1052, %v1068
          %v1073 = vmul.f32 %v1053, %v1068
          %v1074 = vmul.f32 %v1054, %v1068
          %v1075 = vmul.f32 %v1055, %v1068
          %v1076 = vmul.f32 %v1056, %v1068
          %v1077 = vmul.f32 %v1057, %v1068
          %v1078 = vmul.f32 %v1058, %v1068
          %v1079 = vmul.f32 %v1059, %v1068
          %v1080 = vmul.f32 %v1060, %v1068
          %v1081 = vmul.f32 %v1061, %v1068
          %v1082 = vmul.f32 %v1062, %v1068
          %v1083 = vmul.f32 %v1063, %v1068
          %v1084 = vmul.f32 %v1064, %v1068
          %v1085 = vmul.f32 %v1065, %v1068
          %v1086 = vsel %vm868, %v1070, 0.0
          %1087 = vadd.xlane.f32.xlu0 %v1086
          %v1088 = vpop.xlane.xlu0 %1087
          %v1089 = vsel %vm868, %v1071, 0.0
          %1090 = vadd.xlane.f32.xlu0 %v1089
          %v1091 = vpop.xlane.xlu0 %1090
          %v1092 = vsel %vm868, %v1072, 0.0
          %1093 = vadd.xlane.f32.xlu0 %v1092
          %v1094 = vpop.xlane.xlu0 %1093
          %v1095 = vsel %vm868, %v1073, 0.0
          %1096 = vadd.xlane.f32.xlu0 %v1095
          %v1097 = vpop.xlane.xlu0 %1096
          %v1098 = vsel %vm868, %v1074, 0.0
          %1099 = vadd.xlane.f32.xlu0 %v1098
          %v1100 = vpop.xlane.xlu0 %1099
          %v1101 = vsel %vm868, %v1075, 0.0
          %1102 = vadd.xlane.f32.xlu0 %v1101
          %v1103 = vpop.xlane.xlu0 %1102
          %v1104 = vsel %vm868, %v1076, 0.0
          %1105 = vadd.xlane.f32.xlu0 %v1104
          %v1106 = vpop.xlane.xlu0 %1105
          %v1107 = vsel %vm868, %v1077, 0.0
          %1108 = vadd.xlane.f32.xlu0 %v1107
          %v1109 = vpop.xlane.xlu0 %1108
          %v1110 = vsel %vm868, %v1078, 0.0
          %1111 = vadd.xlane.f32.xlu0 %v1110
          %v1112 = vpop.xlane.xlu0 %1111
          %v1113 = vsel %vm868, %v1079, 0.0
          %1114 = vadd.xlane.f32.xlu0 %v1113
          %v1115 = vpop.xlane.xlu0 %1114
          %v1116 = vsel %vm868, %v1080, 0.0
          %1117 = vadd.xlane.f32.xlu0 %v1116
          %v1118 = vpop.xlane.xlu0 %1117
          %v1119 = vsel %vm868, %v1081, 0.0
          %1120 = vadd.xlane.f32.xlu0 %v1119
          %v1121 = vpop.xlane.xlu0 %1120
          %v1122 = vsel %vm868, %v1082, 0.0
          %1123 = vadd.xlane.f32.xlu0 %v1122
          %v1124 = vpop.xlane.xlu0 %1123
          %v1125 = vsel %vm868, %v1083, 0.0
          %1126 = vadd.xlane.f32.xlu0 %v1125
          %v1127 = vpop.xlane.xlu0 %1126
          %v1128 = vsel %vm868, %v1084, 0.0
          %1129 = vadd.xlane.f32.xlu0 %v1128
          %v1130 = vpop.xlane.xlu0 %1129
          %v1131 = vsel %vm868, %v1085, 0.0
          %1132 = vadd.xlane.f32.xlu0 %v1131
          %v1133 = vpop.xlane.xlu0 %1132
          %v1134 = vld [vmem:[%s3] sm:$0xff]
          %v1135 = vld [vmem:[%s3 + $0x8] sm:$0xff]
          %vm1136 = vcmp.gt.f32.partialorder %v1134, 0.5
          %vm1137 = vcmp.gt.f32.partialorder %v1135, 0.5
          %v1154 = vlaneseq
          %v1155 = vand.u32 %v1154, 127
          %v1156 = vperm.slane %v1088, %v1155
          %v1157 = vperm.slane %v1091, %v1155
          %v1158 = vperm.slane %v1094, %v1155
          %v1159 = vperm.slane %v1097, %v1155
          %v1160 = vperm.slane %v1100, %v1155
          %v1161 = vperm.slane %v1103, %v1155
          %v1162 = vperm.slane %v1106, %v1155
          %v1163 = vperm.slane %v1109, %v1155
          %v1164 = vperm.slane %v1112, %v1155
          %v1165 = vperm.slane %v1115, %v1155
          %v1166 = vperm.slane %v1118, %v1155
          %v1167 = vperm.slane %v1121, %v1155
          %v1168 = vperm.slane %v1124, %v1155
          %v1169 = vperm.slane %v1127, %v1155
          %v1170 = vperm.slane %v1130, %v1155
          %v1171 = vperm.slane %v1133, %v1155
          %vm1172 = vcmask 1041409
          %v1173 = vsel %vm1172, %v1157, %v1156
          %vm1174 = vcmask 1042434
          %v1175 = vsel %vm1174, %v1158, %v1173
          %vm1176 = vcmask 1043459
          %v1177 = vsel %vm1176, %v1159, %v1175
          %vm1178 = vcmask 1044484
          %v1179 = vsel %vm1178, %v1160, %v1177
          %vm1180 = vcmask 1045509
          %v1181 = vsel %vm1180, %v1161, %v1179
          %vm1182 = vcmask 1046534
          %v1183 = vsel %vm1182, %v1162, %v1181
          %vm1184 = vcmask 1047559
          %v1185 = vsel %vm1184, %v1163, %v1183
          %v1186 = vsel %vm1172, %v1165, %v1164
          %v1187 = vsel %vm1174, %v1166, %v1186
          %v1188 = vsel %vm1176, %v1167, %v1187
          %v1189 = vsel %vm1178, %v1168, %v1188
          %v1190 = vsel %vm1180, %v1169, %v1189
          %v1191 = vsel %vm1182, %v1170, %v1190
          %v1192 = vsel %vm1184, %v1171, %v1191
          %v1195 = vsel %vm1136, -1000000.0, %v1185
          %v1196 = vsel %vm1137, -1000000.0, %v1192
          %vm1197 = vcmask 64512
          %v1198 = vsel %vm1197, %v1195, -inf
          %v1199 = vsel %vm1197, %v1196, -inf
          %v1200 = vmax.f32 %v1198, %v1199
          %v1201 = vrot.slane %v1200, 4
          %v1202 = vmax.f32 %v1200, %v1201
          %v1203 = vrot.slane %v1202, 2
          %v1204 = vmax.f32 %v1202, %v1203
          %v1205 = vrot.slane %v1204, 1
          %v1206 = vmax.f32 %v1204, %v1205
          %v1207 = vsub.f32 %v1195, %v1206
          %v1208 = vsub.f32 %v1196, %v1206
          %v1209 = vmul.f32 %v1207, 1.442695
          %v1210 = vpow.pop %v1209
          %v1211 = vmul.f32 %v1208, 1.442695
          %v1212 = vpow.pop %v1211
          %v1213 = vsel %vm1197, %v1210, 0.0
          %v1214 = vsel %vm1197, %v1212, 0.0
          %v1215 = vadd.f32 %v1213, %v1214
          %v1216 = vrot.slane %v1215, 4
          %v1217 = vadd.f32 %v1215, %v1216
          %v1218 = vrot.slane %v1217, 2
          %v1219 = vadd.f32 %v1217, %v1218
          %v1220 = vrot.slane %v1219, 1
          %v1221 = vadd.f32 %v1219, %v1220
          %v1222 = vrcp.pop %v1221
          %v1223 = vmul.f32 %v1210, %v1222
          %v1224 = vmul.f32 %v1212, %v1222
          %v1225 = vperm.slane %v1223, 0
          %v1226 = vlaneseq
          %v1227 = vshrl.u32 %v1226, 7
          %1229 = vset.pattern.permute.xlu0 %v1227
          %1230 = vperm.xlu0 %1229, %v1225
          %v1231 = vpop.permute.xlu0 %1230
          %v1232 = vperm.slane %v1223, 1
          %v1233 = vlaneseq
          %v1234 = vshrl.u32 %v1233, 7
          %1236 = vset.pattern.permute.xlu0 %v1234
          %1237 = vperm.xlu0 %1236, %v1232
          %v1238 = vpop.permute.xlu0 %1237
          %v1239 = vperm.slane %v1223, 2
          %v1240 = vlaneseq
          %v1241 = vshrl.u32 %v1240, 7
          %1243 = vset.pattern.permute.xlu0 %v1241
          %1244 = vperm.xlu0 %1243, %v1239
          %v1245 = vpop.permute.xlu0 %1244
          %v1246 = vperm.slane %v1223, 3
          %v1247 = vlaneseq
          %v1248 = vshrl.u32 %v1247, 7
          %1250 = vset.pattern.permute.xlu0 %v1248
          %1251 = vperm.xlu0 %1250, %v1246
          %v1252 = vpop.permute.xlu0 %1251
          %v1253 = vperm.slane %v1223, 4
          %v1254 = vlaneseq
          %v1255 = vshrl.u32 %v1254, 7
          %1257 = vset.pattern.permute.xlu0 %v1255
          %1258 = vperm.xlu0 %1257, %v1253
          %v1259 = vpop.permute.xlu0 %1258
          %v1260 = vperm.slane %v1223, 5
          %v1261 = vlaneseq
          %v1262 = vshrl.u32 %v1261, 7
          %1264 = vset.pattern.permute.xlu0 %v1262
          %1265 = vperm.xlu0 %1264, %v1260
          %v1266 = vpop.permute.xlu0 %1265
          %v1267 = vperm.slane %v1223, 6
          %v1268 = vlaneseq
          %v1269 = vshrl.u32 %v1268, 7
          %1271 = vset.pattern.permute.xlu0 %v1269
          %1272 = vperm.xlu0 %1271, %v1267
          %v1273 = vpop.permute.xlu0 %1272
          %v1274 = vperm.slane %v1223, 7
          %v1275 = vlaneseq
          %v1276 = vshrl.u32 %v1275, 7
          %1278 = vset.pattern.permute.xlu0 %v1276
          %1279 = vperm.xlu0 %1278, %v1274
          %v1280 = vpop.permute.xlu0 %1279
          %v1281 = vperm.slane %v1224, 0
          %v1282 = vlaneseq
          %v1283 = vshrl.u32 %v1282, 7
          %1285 = vset.pattern.permute.xlu0 %v1283
          %1286 = vperm.xlu0 %1285, %v1281
          %v1287 = vpop.permute.xlu0 %1286
          %v1288 = vperm.slane %v1224, 1
          %v1289 = vlaneseq
          %v1290 = vshrl.u32 %v1289, 7
          %1292 = vset.pattern.permute.xlu0 %v1290
          %1293 = vperm.xlu0 %1292, %v1288
          %v1294 = vpop.permute.xlu0 %1293
          %v1295 = vperm.slane %v1224, 2
          %v1296 = vlaneseq
          %v1297 = vshrl.u32 %v1296, 7
          %1299 = vset.pattern.permute.xlu0 %v1297
          %1300 = vperm.xlu0 %1299, %v1295
          %v1301 = vpop.permute.xlu0 %1300
          %v1302 = vperm.slane %v1224, 3
          %v1303 = vlaneseq
          %v1304 = vshrl.u32 %v1303, 7
          %1306 = vset.pattern.permute.xlu0 %v1304
          %1307 = vperm.xlu0 %1306, %v1302
          %v1308 = vpop.permute.xlu0 %1307
          %v1309 = vperm.slane %v1224, 4
          %v1310 = vlaneseq
          %v1311 = vshrl.u32 %v1310, 7
          %1313 = vset.pattern.permute.xlu0 %v1311
          %1314 = vperm.xlu0 %1313, %v1309
          %v1315 = vpop.permute.xlu0 %1314
          %v1316 = vperm.slane %v1224, 5
          %v1317 = vlaneseq
          %v1318 = vshrl.u32 %v1317, 7
          %1320 = vset.pattern.permute.xlu0 %v1318
          %1321 = vperm.xlu0 %1320, %v1316
          %v1322 = vpop.permute.xlu0 %1321
          %v1323 = vperm.slane %v1224, 6
          %v1324 = vlaneseq
          %v1325 = vshrl.u32 %v1324, 7
          %1327 = vset.pattern.permute.xlu0 %v1325
          %1328 = vperm.xlu0 %1327, %v1323
          %v1329 = vpop.permute.xlu0 %1328
          %v1330 = vperm.slane %v1224, 7
          %v1331 = vlaneseq
          %v1332 = vshrl.u32 %v1331, 7
          %1334 = vset.pattern.permute.xlu0 %v1332
          %1335 = vperm.xlu0 %1334, %v1330
          %v1336 = vpop.permute.xlu0 %1335
          %v1337 = vmul.f32 %v1231, %v848
          %v1338 = vmul.f32 %v1238, %v849
          %v1339 = vmul.f32 %v1245, %v850
          %v1340 = vmul.f32 %v1252, %v851
          %v1341 = vmul.f32 %v1259, %v852
          %v1342 = vmul.f32 %v1266, %v853
          %v1343 = vmul.f32 %v1273, %v854
          %v1344 = vmul.f32 %v1280, %v855
          %v1345 = vmul.f32 %v1287, %v856
          %v1346 = vmul.f32 %v1294, %v857
          %v1347 = vmul.f32 %v1301, %v858
          %v1348 = vmul.f32 %v1308, %v859
          %v1349 = vmul.f32 %v1315, %v860
          %v1350 = vmul.f32 %v1322, %v861
          %v1351 = vmul.f32 %v1329, %v862
          %v1352 = vmul.f32 %v1336, %v863
          %v1353 = vsel %vm900, %v1337, 0.0
          %v1354 = vsel %vm900, %v1338, 0.0
          %v1355 = vadd.f32 %v1353, %v1354
          %v1356 = vsel %vm900, %v1339, 0.0
          %v1357 = vadd.f32 %v1355, %v1356
          %v1358 = vsel %vm900, %v1340, 0.0
          %v1359 = vadd.f32 %v1357, %v1358
          %v1360 = vsel %vm900, %v1341, 0.0
          %v1361 = vadd.f32 %v1359, %v1360
          %v1362 = vsel %vm900, %v1342, 0.0
          %v1363 = vadd.f32 %v1361, %v1362
          %v1364 = vsel %vm900, %v1343, 0.0
          %v1365 = vadd.f32 %v1363, %v1364
          %v1366 = vsel %vm900, %v1344, 0.0
          %v1367 = vadd.f32 %v1365, %v1366
          %v1368 = vsel %vm900, %v1345, 0.0
          %v1369 = vadd.f32 %v1367, %v1368
          %v1370 = vsel %vm900, %v1346, 0.0
          %v1371 = vadd.f32 %v1369, %v1370
          %v1372 = vsel %vm900, %v1347, 0.0
          %v1373 = vadd.f32 %v1371, %v1372
          %v1374 = vsel %vm900, %v1348, 0.0
          %v1375 = vadd.f32 %v1373, %v1374
          %v1376 = vsel %vm900, %v1349, 0.0
          %v1377 = vadd.f32 %v1375, %v1376
          %v1378 = vsel %vm900, %v1350, 0.0
          %v1379 = vadd.f32 %v1377, %v1378
          %v1380 = vsel %vm900, %v1351, 0.0
          %v1381 = vadd.f32 %v1379, %v1380
          %v1382 = vsel %vm900, %v1352, 0.0
          %v1383 = vadd.f32 %v1381, %v1382
          %v1384 = vld [vmem:[#allocation4] sm:$0xff]
          %v1385 = vld [vmem:[#allocation4 + $0x8] sm:$0xff]
          %v1386 = vld [vmem:[#allocation4 + $0x10] sm:$0xff]
          %v1387 = vld [vmem:[#allocation4 + $0x18] sm:$0xff]
          %v1388 = vld [vmem:[%s9] sm:$0xff]
          %v1389 = vld [vmem:[%s9 + $0x8] sm:$0xff]
          %v1390 = vld [vmem:[%s9 + $0x10] sm:$0xff]
          %v1391 = vld [vmem:[%s9 + $0x18] sm:$0xff]
          %v1392 = vld [vmem:[%s9 + $0x20] sm:$0xff]
          %v1393 = vld [vmem:[%s9 + $0x28] sm:$0xff]
          %v1394 = vld [vmem:[%s9 + $0x30] sm:$0xff]
          %v1395 = vld [vmem:[%s9 + $0x38] sm:$0xff]
          %v1397 = vsel %vm900, %v1383, 0
          %1399 = vmatpush.msra.mxu0 0.0
          %1400 = vmatpush.msra.mxu0 0.0
          %1401 = vmatpush.msra.mxu0 0.0
          %1402 = vmatpush.msra.mxu0 0.0
          %1403 = vmatpush.msra.mxu0 0.0
          %1404 = vmatpush.msra.mxu0 0.0
          %1405 = vmatpush.msra.mxu0 0.0
          %1406 = vmatpush.msra.mxu0 0.0
          %1407 = vmatpush.msra.mxu0 %v1395
          %1408 = vmatpush.msra.mxu0 %v1394
          %1409 = vmatpush.msra.mxu0 %v1393
          %1410 = vmatpush.msra.mxu0 %v1392
          %1411 = vmatpush.msra.mxu0 %v1391
          %1412 = vmatpush.msra.mxu0 %v1390
          %1413 = vmatpush.msra.mxu0 %v1389
          %1414 = vmatpush.msra.mxu0 %v1388
          %1415 = vmatmul.f32.gmra.mxu0 %v1397
          %v1416 = vpop.f32.mrf.mxu0
          %v1417 = vadd.f32 0.0, %v1416
          %1418 = vdwg.mxu0
          %v1420 = vsel %vm868, %v846, 0
          %1422 = vmatpush.msra.mxu0 0.0
          %1423 = vmatpush.msra.mxu0 0.0
          %1424 = vmatpush.msra.mxu0 0.0
          %1425 = vmatpush.msra.mxu0 0.0
          %1426 = vmatpush.msra.mxu0 0.0
          %1427 = vmatpush.msra.mxu0 0.0
          %1428 = vmatpush.msra.mxu0 0.0
          %1429 = vmatpush.msra.mxu0 0.0
          %1430 = vmatpush.msra.mxu0 0.0
          %1431 = vmatpush.msra.mxu0 0.0
          %1432 = vmatpush.msra.mxu0 0.0
          %1433 = vmatpush.msra.mxu0 0.0
          %1434 = vmatpush.msra.mxu0 %v1387
          %1435 = vmatpush.msra.mxu0 %v1386
          %1436 = vmatpush.msra.mxu0 %v1385
          %1437 = vmatpush.msra.mxu0 %v1384
          %1438 = vmatmul.f32.gmra.mxu0 %v1420
          %v1439 = vpop.f32.mrf.mxu0
          %v1440 = vadd.f32 %v1417, %v1439
          %1441 = vdwg.mxu0
          %v1442 = vld [vmem:[%s11] sm:$0x1]
          %v1444 = vperm.slane %v1442, 0
          %v1446 = vadd.f32 %v1440, %v1444
          %v1447 = vld [vmem:[#allocation7] sm:$0xff]
          %v1448 = vld [vmem:[#allocation7 + $0x8] sm:$0xff]
          %v1449 = vld [vmem:[#allocation7 + $0x10] sm:$0xff]
          %v1450 = vld [vmem:[#allocation7 + $0x18] sm:$0xff]
          %v1451 = vld [vmem:[%s12] sm:$0x1]
          %v1453 = vperm.slane %v1451, 0
          %1455 = vmatpush.msra.mxu0 0.0
          %1456 = vmatpush.msra.mxu0 0.0
          %1457 = vmatpush.msra.mxu0 0.0
          %1458 = vmatpush.msra.mxu0 0.0
          %1459 = vmatpush.msra.mxu0 0.0
          %1460 = vmatpush.msra.mxu0 0.0
          %1461 = vmatpush.msra.mxu0 0.0
          %1462 = vmatpush.msra.mxu0 0.0
          %1463 = vmatpush.msra.mxu0 0.0
          %1464 = vmatpush.msra.mxu0 0.0
          %1465 = vmatpush.msra.mxu0 0.0
          %1466 = vmatpush.msra.mxu0 0.0
          %1467 = vmatpush.msra.mxu0 %v1450
          %1468 = vmatpush.msra.mxu0 %v1449
          %1469 = vmatpush.msra.mxu0 %v1448
          %1470 = vmatpush.msra.mxu0 %v1447
          %1471 = vmatmul.f32.gmra.mxu0 %v870
          %v1472 = vpop.f32.mrf.mxu0
          %v1473 = vadd.f32 %v1453, %v1472
          %1474 = vdwg.mxu0
          %v1475 = vadd.f32 %v1446, %v1473
          %v1476 = vxor.u32 %v1475, 2147483648
          %v1477 = vmul.f32 %v1476, 1.442695
          %v1478 = vpow.pop %v1477
          %v1479 = vadd.f32 %v1478, 1.0
          %v1480 = vrcp.pop %v1479
          %v1481 = vmul.f32 %v1479, %v1480
          %v1482 = vsub.f32 1.0, %v1481
          %v1483 = vmul.f32 %v1480, %v1482
          %v1484 = vadd.f32 %v1480, %v1483
          %vm1485 = vweird.f32 %v1479
          %vm1486 = vweird.f32 %v1480
          %vm1487 = vmor %vm1485, %vm1486
          %v1488 = vsel %vm1487, %v1480, %v1484
          %v1489 = vand.u32 2147483647, %v1479
          %vm1490 = vcmp.eq.f32.partialorder %v1489, 8.507059e+37
          %v1491 = vand.u32 %v1479, 2147483648
          %v1492 = vor.u32 1.1754944e-38, %v1491
          %v1493 = vsel %vm1490, %v1492, %v1488
          %v1494 = vmul.f32 1.0, %v1493
          %1496 = vrot.lane.b32.xlu0 %v1473, 64
          %v1497 = vpop.permute.xlu0 %1496
          %v1499 = vmul.f32 %v1494, %v1497
          %1501 = vrot.lane.b32.xlu0 %v1499, 64
          %v1502 = vpop.permute.xlu0 %1501
          %v1504 = vadd.f32 %v1446, %v1502
          %v1505 = vtanh.pop %v1504
          %v1506 = vsub.f32 1.0, %v1494
          %1508 = vrot.lane.b32.xlu0 %v1505, 96
          %v1509 = vpop.permute.xlu0 %1508
          %v1511 = vmul.f32 %v1506, %v1509
          %1512 = vrot.lane.b32.xlu0 %v847, 32
          %v1513 = vpop.permute.xlu0 %1512
          %v1515 = vmul.f32 %v1494, %v1513
          %v1516 = vadd.f32 %v1511, %v1515
          %1518 = vrot.lane.b32.xlu0 %v1516, 96
          %v1519 = vpop.permute.xlu0 %1518
          %1521 = vst.msk [vmem:[#allocation2] sm:$0xff] %vm868, %v1519
          %1522 = vst.msk [vmem:[#allocation3] sm:$0xff] %vm900, %v1383
          %1523 = vst.msk [vmem:[#allocation13] sm:$0xff] %vm868, %v1519
          %1524 = vst.msk [vmem:[%s19] sm:$0xff] %vm1197, %v1223
          %1525 = vst.msk [vmem:[%s19 + $0x8] sm:$0xff] %vm1197, %v1224
        $region214: #{decoder_forward.1} parent=189 // pred_fallthru
          _
        %v1526 = vld [vmem:[#allocation2] sm:$0xff]
        %v1527 = vld [vmem:[%s761] sm:$0xff]
        %v1528 = vld [vmem:[%s761 + $0x8] sm:$0xff]
        %v1529 = vld [vmem:[%s761 + $0x10] sm:$0xff]
        %v1530 = vld [vmem:[%s761 + $0x18] sm:$0xff]
        %v1531 = vld [vmem:[#allocation3] sm:$0xff]
        %v1532 = vld [vmem:[%s768] sm:$0xff]
        %v1533 = vld [vmem:[%s768 + $0x8] sm:$0xff]
        %v1534 = vld [vmem:[%s768 + $0x10] sm:$0xff]
        %v1535 = vld [vmem:[%s768 + $0x18] sm:$0xff]
        %v1536 = vld [vmem:[%s768 + $0x20] sm:$0xff]
        %v1537 = vld [vmem:[%s768 + $0x28] sm:$0xff]
        %v1538 = vld [vmem:[%s768 + $0x30] sm:$0xff]
        %v1539 = vld [vmem:[%s768 + $0x38] sm:$0xff]
        %vm1540 = vcmask 523264
        %v1542 = vsel %vm1540, %v1531, 0
        %1544 = vmatpush.msra.mxu0 0.0
        %1545 = vmatpush.msra.mxu0 0.0
        %1546 = vmatpush.msra.mxu0 0.0
        %1547 = vmatpush.msra.mxu0 0.0
        %1548 = vmatpush.msra.mxu0 0.0
        %1549 = vmatpush.msra.mxu0 0.0
        %1550 = vmatpush.msra.mxu0 0.0
        %1551 = vmatpush.msra.mxu0 0.0
        %1552 = vmatpush.msra.mxu0 %v1539
        %1553 = vmatpush.msra.mxu0 %v1538
        %1554 = vmatpush.msra.mxu0 %v1537
        %1555 = vmatpush.msra.mxu0 %v1536
        %1556 = vmatpush.msra.mxu0 %v1535
        %1557 = vmatpush.msra.mxu0 %v1534
        %1558 = vmatpush.msra.mxu0 %v1533
        %1559 = vmatpush.msra.mxu0 %v1532
        %1560 = vmatmul.f32.gmra.mxu0 %v1542
        %v1561 = vpop.f32.mrf.mxu0
        %v1562 = vadd.f32 0.0, %v1561
        %1563 = vdwg.mxu0
        %vm1564 = vcmask 261120
        %v1566 = vsel %vm1564, %v1526, 0
        %1568 = vmatpush.msra.mxu0 0.0
        %1569 = vmatpush.msra.mxu0 0.0
        %1570 = vmatpush.msra.mxu0 0.0
        %1571 = vmatpush.msra.mxu0 0.0
        %1572 = vmatpush.msra.mxu0 0.0
        %1573 = vmatpush.msra.mxu0 0.0
        %1574 = vmatpush.msra.mxu0 0.0
        %1575 = vmatpush.msra.mxu0 0.0
        %1576 = vmatpush.msra.mxu0 0.0
        %1577 = vmatpush.msra.mxu0 0.0
        %1578 = vmatpush.msra.mxu0 0.0
        %1579 = vmatpush.msra.mxu0 0.0
        %1580 = vmatpush.msra.mxu0 %v1530
        %1581 = vmatpush.msra.mxu0 %v1529
        %1582 = vmatpush.msra.mxu0 %v1528
        %1583 = vmatpush.msra.mxu0 %v1527
        %1584 = vmatmul.f32.gmra.mxu0 %v1566
        %v1585 = vpop.f32.mrf.mxu0
        %v1586 = vadd.f32 %v1562, %v1585
        %1587 = vdwg.mxu0
        %v1588 = vld [vmem:[%s0] sm:$0xff]
        %v1589 = vld [vmem:[%s775] sm:$0xff]
        %v1590 = vld [vmem:[%s775 + $0x8] sm:$0xff]
        %v1591 = vld [vmem:[%s775 + $0x10] sm:$0xff]
        %v1592 = vld [vmem:[%s775 + $0x18] sm:$0xff]
        %v1594 = vsel %vm1564, %v1588, 0
        %1596 = vmatpush.msra.mxu0 0.0
        %1597 = vmatpush.msra.mxu0 0.0
        %1598 = vmatpush.msra.mxu0 0.0
        %1599 = vmatpush.msra.mxu0 0.0
        %1600 = vmatpush.msra.mxu0 0.0
        %1601 = vmatpush.msra.mxu0 0.0
        %1602 = vmatpush.msra.mxu0 0.0
        %1603 = vmatpush.msra.mxu0 0.0
        %1604 = vmatpush.msra.mxu0 0.0
        %1605 = vmatpush.msra.mxu0 0.0
        %1606 = vmatpush.msra.mxu0 0.0
        %1607 = vmatpush.msra.mxu0 0.0
        %1608 = vmatpush.msra.mxu0 %v1592
        %1609 = vmatpush.msra.mxu0 %v1591
        %1610 = vmatpush.msra.mxu0 %v1590
        %1611 = vmatpush.msra.mxu0 %v1589
        %1612 = vmatmul.f32.gmra.mxu0 %v1594
        %v1613 = vpop.f32.mrf.mxu0
        %v1614 = vadd.f32 0.0, %v1613
        %1615 = vdwg.mxu0
        %v1616 = vadd.f32 %v1586, %v1614
        %v1617 = vld [vmem:[%s841] sm:$0x1]
        %v1619 = vperm.slane %v1617, 0
        %v1621 = vadd.f32 %v1616, %v1619
        %1622 = vst [vmem:[%s834] sm:$0xff] %v1621
        %s1623 = sand.u32 %s422, 1
        %s1624 = scalar_lea.sflag [#allocation6], %s1623
        %s1625 = sand.u32 %s422, 1
        %s1626 = smul.addr %s1625, 8
        %s1627 = scalar_lea.vmem [#allocation12], %s1626
        // Predicated region
        $region215: #{decoder_forward.1} parent=189 // pred_check
          %p1628 = pneg %p432
        $region216: #{decoder_forward.1} parent=189 // pred_check_branch
          %1630 = sbr.rel (%p1628) target = $region218
        $region217: #{decoder_forward.1} parent=189 // pred_region
          %1632 = vsyncadd %s1624, 0
          %s1633 = smul.addr %s37, 8
          %s1634 = scalar_lea.hbm %s17, %s1633
          %s1636 = sshll.u32 %s1627, 4
          %s1637 = int_to_ptr.vmem [resolvable:$true] %s1636
          %s1638 = sshll.u32 %s1634, 4
          %s1639 = int_to_ptr.hbm [resolvable:$true] %s1638
          %1641 = dma.vmem_to_hbm [thread:$0]  %s1637, 128, %s1639, %s1624
        $region218: #{decoder_forward.1} parent=189 // pred_fallthru
          _
        // Predicated region
        $region219: #{decoder_forward.1} parent=189 // pred_check
          %p1642 = pneg %p453
        $region220: #{decoder_forward.1} parent=189 // pred_check_branch
          %1644 = sbr.rel (%p1642) target = $region222
        $region221: #{decoder_forward.1} parent=189 // pred_region
          %1646 = vsyncadd [#allocation14], 0
          %s1648 = sshll.u32 [#allocation13], 4
          %s1649 = int_to_ptr.vmem [resolvable:$true] %s1648
          %s1650 = sshll.u32 %s18, 4
          %s1651 = int_to_ptr.hbm [resolvable:$true] %s1650
          %1653 = dma.vmem_to_hbm [thread:$0]  %s1649, 128, %s1651, [#allocation14]
        $region222: #{decoder_forward.1} parent=189 // pred_fallthru
          _
        // Predicated region
        $region223: #{decoder_forward.1} parent=189 // pred_check
          %p1654 = pneg %p474
        $region224: #{decoder_forward.1} parent=189 // pred_check_branch
          %1656 = sbr.rel (%p1654) target = $region226
        $region225: #{decoder_forward.1} parent=189 // pred_region
          _
        $region226: #{decoder_forward.1} parent=189 // pred_fallthru
          _
        // Predicated region
        $region227: #{decoder_forward.1} parent=189 // pred_check
          %p1657 = pneg %p453
        $region228: #{decoder_forward.1} parent=189 // pred_check_branch
          %1659 = sbr.rel (%p1657) target = $region230
        $region229: #{decoder_forward.1} parent=189 // pred_region
          %1661 = dma.done [#allocation14], 128
        $region230: #{decoder_forward.1} parent=189 // pred_fallthru
          _
        // Predicated region
        $region231: #{decoder_forward.1} parent=189 // pred_check
          %p1662 = pneg %p474
        $region232: #{decoder_forward.1} parent=189 // pred_check_branch
          %1664 = sbr.rel (%p1662) target = $region234
        $region233: #{decoder_forward.1} parent=189 // pred_region
          _
        $region234: #{decoder_forward.1} parent=189 // pred_fallthru
          _
      $region190: #{decoder_forward.1} parent=5 // pred_fallthru
        _
      %p1665 = scmp.le.s32.totalorder 2, %s32
      // Predicated region
      $region235: #{decoder_forward.1} parent=5 // pred_check
        %p1666 = pneg %p1665
      $region236: #{decoder_forward.1} parent=5 // pred_check_branch
        %1668 = sbr.rel (%p1666) target = $region238
      $region237: #{decoder_forward.1} parent=5 // pred_region
        %s1669 = ssub.s32 %s32, 2
        // Predicated region
        $region239: #{decoder_forward.1} parent=237 // pred_check
          %p1670 = pneg %p438
        $region240: #{decoder_forward.1} parent=237 // pred_check_branch
          %1672 = sbr.rel (%p1670) target = $region242
        $region241: #{decoder_forward.1} parent=237 // pred_region
          %s1673 = sand.u32 %s423, 1
          %s1674 = scalar_lea.sflag [#allocation6], %s1673
          %s1675 = sand.u32 %s423, 1
          %s1676 = smul.addr %s1675, 8
          %s1677 = scalar_lea.vmem [#allocation12], %s1676
          %1679 = dma.done %s1674, 128
        $region242: #{decoder_forward.1} parent=237 // pred_fallthru
          _
      $region238: #{decoder_forward.1} parent=5 // pred_fallthru
        _
    $region6: #{decoder_forward.1} parent=1 // loop_footer
      %s36 = sadd.s32 1, %s32
    $region7: #{decoder_forward.1} parent=1 // loop_footer_branch
      %31 = sbr.rel target = $region3
    $region8: #{decoder_forward.1} parent=1 // loop_exit
      _
    %1680 = vsyncpa [#allocation5], 1
    %s1681 = scalar_lea.sflag [#allocation5], 1
    %1682 = vsyncpa %s1681, 1
    %1683 = vsyncpa [#allocation8], 1
    %1684 = vsyncpa [#allocation6], 1
    %s1685 = scalar_lea.sflag [#allocation6], 1
    %1686 = vsyncpa %s1685, 1
    %1687 = vsyncpa [#allocation14], 1

</llo_original>
